<compile_context>
chip_gen: v7x
topology: tpu7x:2x2x1
jax: 0.10.0
libtpu: 0.0.40
codegen_flags: <defaults>
</compile_context>

<pallas_src>
import functools

import jax
import jax.numpy as jnp
from jax.experimental import pallas as pl
from jax.experimental.pallas import tpu as pltpu


def _round_up(x: int, m: int) -> int:
    return ((x + m - 1) // m) * m


def _kpconv_kernel(diff_ref, feat_ref, kpts_ref, w_ref, out_ref, *,
                   inv_sigma, d, H, H_pad, K, C_pad):
    """One query tile (TQ queries, all neighbors / kernel points).

    diff_ref : (d*H_pad, TQ)      f32  row = c*H_pad + h
    feat_ref : (H_pad*C_pad, TQ)  f32  row = h*C_pad + c
    kpts_ref : (K*d,)             f32  SMEM scalars, idx = k*d + c
    w_ref    : (O_pad, K*C_pad)   f32  col = k*C_pad + c
    out_ref  : (O_pad, TQ)        f32
    """
    TQ = out_ref.shape[1]

    # ---- squared distance (neighbor offset -> kernel point), lane-dense ----
    # Each coordinate plane is an (H_pad, TQ) slab: 8 sublanes x TQ lanes.
    dcoord = [diff_ref[pl.ds(c * H_pad, H_pad), :] for c in range(d)]

    def d2_to(k):
        acc = None
        for c in range(d):
            t = dcoord[c] - kpts_ref[k * d + c]        # SMEM scalar broadcast
            t = t * t
            acc = t if acc is None else acc + t
        return acc                                     # (H_pad, TQ)

    min_d2 = d2_to(0)
    nearest = jnp.zeros((H_pad, TQ), jnp.int32)
    for k in range(1, K):
        d2k = d2_to(k)
        closer = d2k < min_d2                          # strict <: ties keep lowest k
        nearest = jnp.where(closer, jnp.int32(k), nearest)
        min_d2 = jnp.where(closer, d2k, min_d2)
    # influence = relu(1 - dist / sigma); multiply by precomputed 1/sigma.
    infl = jnp.maximum(1.0 - jnp.sqrt(min_d2) * inv_sigma, 0.0)    # (H_pad, TQ)

    # ---- pooled per-kernel-point features, accumulated over H neighbors ----
    # XpT[k*C_pad + c, q] = sum_h [nearest[h,q]==k] * infl[h,q] * feat[h,c,q]
    accs = [None] * K
    for h in range(H):                    # padded h slots have zero features
        feat_h = feat_ref[pl.ds(h * C_pad, C_pad), :]              # (C_pad, TQ)
        infl_h = infl[h:h + 1, :]                                  # (1, TQ)
        near_h = nearest[h:h + 1, :]                               # (1, TQ)
        for k in range(K):
            contrib = jnp.where(near_h == k, infl_h, 0.0) * feat_h
            accs[k] = contrib if accs[k] is None else accs[k] + contrib
    xpt = jnp.concatenate(accs, axis=0)                            # (K*C_pad, TQ)

    # ---- single MXU matmul, f32 in / f32 acc --------------------------------
    out_ref[...] = jnp.dot(w_ref[...], xpt,
                           preferred_element_type=jnp.float32
                           ).astype(out_ref.dtype)


def kpconv_pallas(query_points, support_points, support_features,
                  kernel_points, weights, *, neighbor_count, sigma=1.0,
                  query_tile=256):
    Q, d = query_points.shape
    S = support_points.shape[0]
    H = neighbor_count
    K, C, O = weights.shape
    assert kernel_points.shape == (K, d)
    # The reference module gathers *query* points with support-tree neighbor
    # indices; that is only meaningful when the two point sets line up.
    assert Q == S, "KPConv module quirk: forward() requires Q == S"
    assert query_tile % 128 == 0

    # ---- plain-JAX glue: exact brute-force kNN (KDTree replacement) ---------
    # TODO(synk): KDTree build/query has no Pallas equivalent; exact kNN via a
    #             dense distance matrix + top_k reproduces the same indices.
    d2_qs = jnp.sum(
        (query_points[:, None, :] - support_points[None, :, :]) ** 2, axis=-1)
    _, nbr_idx = jax.lax.top_k(-d2_qs, H)                          # (Q, H)

    # Faithful to the module: it gathers *query* points with the support-tree
    # neighbor indices.
    neighbor_points = query_points[nbr_idx]                        # (Q, H, d)
    neighbor_features = support_features[nbr_idx]                  # (Q, H, C)
    diff = (neighbor_points - query_points[:, None, :]).astype(jnp.float32)
    # TODO(synk): the neighbor gather could move inside the kernel (scalar-
    # prefetched nbr_idx + manual DMA from an HBM feature table) to avoid the
    # H-fold (Q*H, C) HBM duplication for real point-cloud sizes.

    # ---- TPU-friendly padding / layout --------------------------------------
    tile = min(query_tile, _round_up(Q, 128))
    Q_pad = _round_up(Q, tile)
    H_pad = _round_up(H, 8)       # 8-aligned sublane slab per coordinate
    C_pad = _round_up(C, 8)       # 8-aligned sublane block per kernel point
    O_pad = _round_up(O, 8)

    # NOTE: padded queries q in [Q, Q_pad) and padded neighbor slots
    # h in [H, H_pad) contribute exactly zero ONLY because their features are
    # zero (their influence can be nonzero).  Keep feature padding at zero.
    diff_pad = jnp.zeros((Q_pad, H_pad, d), jnp.float32)
    diff_pad = diff_pad.at[:Q, :H, :].set(diff)
    diff_t = jnp.transpose(diff_pad, (2, 1, 0)).reshape(d * H_pad, Q_pad)

    feat_pad = jnp.zeros((Q_pad, H_pad, C_pad), jnp.float32)
    feat_pad = feat_pad.at[:Q, :H, :C].set(neighbor_features.astype(jnp.float32))
    feat_t = jnp.transpose(feat_pad, (1, 2, 0)).reshape(H_pad * C_pad, Q_pad)

    kpts_flat = kernel_points.astype(jnp.float32).reshape(K * d)   # SMEM scalars

    w_pad = jnp.zeros((K, C_pad, O_pad), jnp.float32)
    w_pad = w_pad.at[:, :C, :O].set(weights.astype(jnp.float32))
    w_t = jnp.transpose(w_pad, (2, 0, 1)).reshape(O_pad, K * C_pad)

    grid = (Q_pad // tile,)
    kernel = functools.partial(_kpconv_kernel, inv_sigma=float(1.0 / sigma),
                               d=d, H=H, H_pad=H_pad, K=K, C_pad=C_pad)

    flops = (2 * O_pad * (K * C_pad) * Q_pad            # fused MXU matmul
             + Q_pad * H_pad * K * (3 * d + 4)          # distances + argmin
             + Q_pad * H * K * (2 * C_pad + 3))         # masked pooled build
    bytes_accessed = 4 * (diff_t.size + feat_t.size + kpts_flat.size
                          + w_t.size + O_pad * Q_pad)
    cost = pl.CostEstimate(flops=int(flops), transcendentals=int(Q_pad * H_pad),
                           bytes_accessed=int(bytes_accessed))

    out_t = pl.pallas_call(
        kernel,
        out_shape=jax.ShapeDtypeStruct((O_pad, Q_pad), jnp.float32),
        grid_spec=pltpu.PrefetchScalarGridSpec(
            num_scalar_prefetch=0,
            grid=grid,
            in_specs=[
                pl.BlockSpec((d * H_pad, tile), lambda i: (0, i)),      # diff
                pl.BlockSpec((H_pad * C_pad, tile), lambda i: (0, i)),  # feats
                pl.BlockSpec(memory_space=pltpu.MemorySpace.SMEM),      # kpts
                pl.BlockSpec((O_pad, K * C_pad), lambda i: (0, 0)),     # weights
            ],
            out_specs=pl.BlockSpec((O_pad, tile), lambda i: (0, i)),
        ),
        compiler_params=pltpu.CompilerParams(
            dimension_semantics=("parallel",),
            vmem_limit_bytes=32 * 1024 * 1024),
        cost_estimate=cost,
    )(diff_t, feat_t, kpts_flat, w_t)

    return out_t[:O, :Q].T                                          # (Q, O)


def kpconv_reference(query_points, support_points, support_features,
                     kernel_points, weights, *, neighbor_count, sigma=1.0):
    """Pure-JAX f32 replica of the PyTorch forward (default branch)."""
    d2 = jnp.sum((query_points[:, None, :] - support_points[None, :, :]) ** 2,
                 axis=-1)
    _, nbr_idx = jax.lax.top_k(-d2, neighbor_count)
    neighbor_points = query_points[nbr_idx]
    neighbor_features = support_features[nbr_idx]
    diff = neighbor_points - query_points[:, None, :]
    kd2 = jnp.sum((diff[:, :, None, :] - kernel_points[None, None, :, :]) ** 2,
                  axis=-1)
    kpi = jnp.argmin(kd2, axis=-1)
    dist = jnp.sqrt(jnp.min(kd2, axis=-1))
    infl = jnp.maximum(1.0 - dist / sigma, 0.0)
    return jnp.einsum('qh,qhco,qhc->qo', infl, weights[kpi], neighbor_features,
                      precision=jax.lax.Precision.HIGHEST)


if __name__ == "__main__":
    # The module gathers query points with support-tree indices -> keep Q == S.
    Q = S = 2048                 # query / support point counts -> 8 grid steps
    D = 3                        # spatial dim
    H = 8                        # neighbor_count
    K = 8                        # number of kernel points
    C_IN, C_OUT = 16, 32
    SIGMA = 1.0

    key = jax.random.PRNGKey(0)
    kq, ks, kf, kk, kw = jax.random.split(key, 5)
    query_points = jax.random.normal(kq, (Q, D), jnp.float32)
    support_points = jax.random.normal(ks, (S, D), jnp.float32)
    support_features = jax.random.normal(kf, (S, C_IN), jnp.float32)
    kernel_points = 0.5 * jax.random.normal(kk, (K, D), jnp.float32)
    weights = jax.random.normal(kw, (K, C_IN, C_OUT), jnp.float32)  # torch.randn

    out = kpconv_pallas(query_points, support_points, support_features,
                        kernel_points, weights,
                        neighbor_count=H, sigma=SIGMA, query_tile=256)
    out = jax.block_until_ready(out)

    ref = kpconv_reference(query_points, support_points, support_features,
                           kernel_points, weights,
                           neighbor_count=H, sigma=SIGMA)
    ref = jax.block_until_ready(ref)

    assert out.shape == (Q, C_OUT)
    max_err = jnp.max(jnp.abs(out - ref))
    # All-f32 pipeline; tolerance still covers a worst-case reduced-precision
    # MXU pass (observed error is typically ~1e-5).
    assert jnp.allclose(out, ref, atol=1e-1, rtol=2e-2), f"max abs err {max_err}"
    print("KERNEL_OK")
</pallas_src>

<mosaic_0001>
module attributes {stable_mosaic.version = 11 : i64} {
  func.func @_kpconv_kernel(%arg0: i32, %arg1: memref<24x256xf32, #tpu.memory_space<vmem>>, %arg2: memref<128x256xf32, #tpu.memory_space<vmem>>, %arg3: memref<24xf32, #tpu.memory_space<smem>>, %arg4: memref<32x128xf32, #tpu.memory_space<vmem>>, %arg5: memref<32x256xf32, #tpu.memory_space<vmem>>) attributes {dimension_semantics = [#tpu.dimension_semantics<parallel>], iteration_bounds = array<i64: 8>, scalar_prefetch = 0 : i64, scratch_operands = 0 : i64, tpu.core_type = #tpu.core_type<tc>, window_params = [{transform_indices = @transform_0, window_bounds = array<i64: 24, 256>}, {transform_indices = @transform_1, window_bounds = array<i64: 128, 256>}, {transform_indices = @transform_2, window_bounds = array<i64: 24>}, {pipeline_mode = #tpu.pipeline_mode<synchronous>, transform_indices = @transform_3, window_bounds = array<i64: 32, 128>}, {transform_indices = @transform_4, window_bounds = array<i64: 32, 256>}]} {
    %c0 = arith.constant 0 : index
    %c0_0 = arith.constant 0 : index
    %0 = vector.load %arg1[%c0, %c0_0] : memref<24x256xf32, #tpu.memory_space<vmem>>, vector<8x256xf32>
    %c8 = arith.constant 8 : index
    %c0_1 = arith.constant 0 : index
    %1 = vector.load %arg1[%c8, %c0_1] : memref<24x256xf32, #tpu.memory_space<vmem>>, vector<8x256xf32>
    %c16 = arith.constant 16 : index
    %c0_2 = arith.constant 0 : index
    %2 = vector.load %arg1[%c16, %c0_2] : memref<24x256xf32, #tpu.memory_space<vmem>>, vector<8x256xf32>
    %c0_3 = arith.constant 0 : index
    %3 = memref.load %arg3[%c0_3] : memref<24xf32, #tpu.memory_space<smem>>
    %4 = vector.broadcast %3 : f32 to vector<8x256xf32>
    %5 = arith.subf %0, %4 : vector<8x256xf32>
    %6 = arith.mulf %5, %5 : vector<8x256xf32>
    %c1 = arith.constant 1 : index
    %7 = memref.load %arg3[%c1] : memref<24xf32, #tpu.memory_space<smem>>
    %8 = vector.broadcast %7 : f32 to vector<8x256xf32>
    %9 = arith.subf %1, %8 : vector<8x256xf32>
    %10 = arith.mulf %9, %9 : vector<8x256xf32>
    %11 = arith.addf %6, %10 : vector<8x256xf32>
    %c2 = arith.constant 2 : index
    %12 = memref.load %arg3[%c2] : memref<24xf32, #tpu.memory_space<smem>>
    %13 = vector.broadcast %12 : f32 to vector<8x256xf32>
    %14 = arith.subf %2, %13 : vector<8x256xf32>
    %15 = arith.mulf %14, %14 : vector<8x256xf32>
    %16 = arith.addf %11, %15 : vector<8x256xf32>
    %c0_i32 = arith.constant 0 : i32
    %17 = vector.broadcast %c0_i32 : i32 to vector<8x256xi32>
    %c3 = arith.constant 3 : index
    %18 = memref.load %arg3[%c3] : memref<24xf32, #tpu.memory_space<smem>>
    %19 = vector.broadcast %18 : f32 to vector<8x256xf32>
    %20 = arith.subf %0, %19 : vector<8x256xf32>
    %21 = arith.mulf %20, %20 : vector<8x256xf32>
    %c4 = arith.constant 4 : index
    %22 = memref.load %arg3[%c4] : memref<24xf32, #tpu.memory_space<smem>>
    %23 = vector.broadcast %22 : f32 to vector<8x256xf32>
    %24 = arith.subf %1, %23 : vector<8x256xf32>
    %25 = arith.mulf %24, %24 : vector<8x256xf32>
    %26 = arith.addf %21, %25 : vector<8x256xf32>
    %c5 = arith.constant 5 : index
    %27 = memref.load %arg3[%c5] : memref<24xf32, #tpu.memory_space<smem>>
    %28 = vector.broadcast %27 : f32 to vector<8x256xf32>
    %29 = arith.subf %2, %28 : vector<8x256xf32>
    %30 = arith.mulf %29, %29 : vector<8x256xf32>
    %31 = arith.addf %26, %30 : vector<8x256xf32>
    %32 = arith.cmpf olt, %31, %16 : vector<8x256xf32>
    %c1_i32 = arith.constant 1 : i32
    %33 = vector.broadcast %c1_i32 : i32 to vector<8x256xi32>
    %34 = arith.select %32, %33, %17 : vector<8x256xi1>, vector<8x256xi32>
    %35 = arith.select %32, %31, %16 : vector<8x256xi1>, vector<8x256xf32>
    %c6 = arith.constant 6 : index
    %36 = memref.load %arg3[%c6] : memref<24xf32, #tpu.memory_space<smem>>
    %37 = vector.broadcast %36 : f32 to vector<8x256xf32>
    %38 = arith.subf %0, %37 : vector<8x256xf32>
    %39 = arith.mulf %38, %38 : vector<8x256xf32>
    %c7 = arith.constant 7 : index
    %40 = memref.load %arg3[%c7] : memref<24xf32, #tpu.memory_space<smem>>
    %41 = vector.broadcast %40 : f32 to vector<8x256xf32>
    %42 = arith.subf %1, %41 : vector<8x256xf32>
    %43 = arith.mulf %42, %42 : vector<8x256xf32>
    %44 = arith.addf %39, %43 : vector<8x256xf32>
    %c8_4 = arith.constant 8 : index
    %45 = memref.load %arg3[%c8_4] : memref<24xf32, #tpu.memory_space<smem>>
    %46 = vector.broadcast %45 : f32 to vector<8x256xf32>
    %47 = arith.subf %2, %46 : vector<8x256xf32>
    %48 = arith.mulf %47, %47 : vector<8x256xf32>
    %49 = arith.addf %44, %48 : vector<8x256xf32>
    %50 = arith.cmpf olt, %49, %35 : vector<8x256xf32>
    %c2_i32 = arith.constant 2 : i32
    %51 = vector.broadcast %c2_i32 : i32 to vector<8x256xi32>
    %52 = arith.select %50, %51, %34 : vector<8x256xi1>, vector<8x256xi32>
    %53 = arith.select %50, %49, %35 : vector<8x256xi1>, vector<8x256xf32>
    %c9 = arith.constant 9 : index
    %54 = memref.load %arg3[%c9] : memref<24xf32, #tpu.memory_space<smem>>
    %55 = vector.broadcast %54 : f32 to vector<8x256xf32>
    %56 = arith.subf %0, %55 : vector<8x256xf32>
    %57 = arith.mulf %56, %56 : vector<8x256xf32>
    %c10 = arith.constant 10 : index
    %58 = memref.load %arg3[%c10] : memref<24xf32, #tpu.memory_space<smem>>
    %59 = vector.broadcast %58 : f32 to vector<8x256xf32>
    %60 = arith.subf %1, %59 : vector<8x256xf32>
    %61 = arith.mulf %60, %60 : vector<8x256xf32>
    %62 = arith.addf %57, %61 : vector<8x256xf32>
    %c11 = arith.constant 11 : index
    %63 = memref.load %arg3[%c11] : memref<24xf32, #tpu.memory_space<smem>>
    %64 = vector.broadcast %63 : f32 to vector<8x256xf32>
    %65 = arith.subf %2, %64 : vector<8x256xf32>
    %66 = arith.mulf %65, %65 : vector<8x256xf32>
    %67 = arith.addf %62, %66 : vector<8x256xf32>
    %68 = arith.cmpf olt, %67, %53 : vector<8x256xf32>
    %c3_i32 = arith.constant 3 : i32
    %69 = vector.broadcast %c3_i32 : i32 to vector<8x256xi32>
    %70 = arith.select %68, %69, %52 : vector<8x256xi1>, vector<8x256xi32>
    %71 = arith.select %68, %67, %53 : vector<8x256xi1>, vector<8x256xf32>
    %c12 = arith.constant 12 : index
    %72 = memref.load %arg3[%c12] : memref<24xf32, #tpu.memory_space<smem>>
    %73 = vector.broadcast %72 : f32 to vector<8x256xf32>
    %74 = arith.subf %0, %73 : vector<8x256xf32>
    %75 = arith.mulf %74, %74 : vector<8x256xf32>
    %c13 = arith.constant 13 : index
    %76 = memref.load %arg3[%c13] : memref<24xf32, #tpu.memory_space<smem>>
    %77 = vector.broadcast %76 : f32 to vector<8x256xf32>
    %78 = arith.subf %1, %77 : vector<8x256xf32>
    %79 = arith.mulf %78, %78 : vector<8x256xf32>
    %80 = arith.addf %75, %79 : vector<8x256xf32>
    %c14 = arith.constant 14 : index
    %81 = memref.load %arg3[%c14] : memref<24xf32, #tpu.memory_space<smem>>
    %82 = vector.broadcast %81 : f32 to vector<8x256xf32>
    %83 = arith.subf %2, %82 : vector<8x256xf32>
    %84 = arith.mulf %83, %83 : vector<8x256xf32>
    %85 = arith.addf %80, %84 : vector<8x256xf32>
    %86 = arith.cmpf olt, %85, %71 : vector<8x256xf32>
    %c4_i32 = arith.constant 4 : i32
    %87 = vector.broadcast %c4_i32 : i32 to vector<8x256xi32>
    %88 = arith.select %86, %87, %70 : vector<8x256xi1>, vector<8x256xi32>
    %89 = arith.select %86, %85, %71 : vector<8x256xi1>, vector<8x256xf32>
    %c15 = arith.constant 15 : index
    %90 = memref.load %arg3[%c15] : memref<24xf32, #tpu.memory_space<smem>>
    %91 = vector.broadcast %90 : f32 to vector<8x256xf32>
    %92 = arith.subf %0, %91 : vector<8x256xf32>
    %93 = arith.mulf %92, %92 : vector<8x256xf32>
    %c16_5 = arith.constant 16 : index
    %94 = memref.load %arg3[%c16_5] : memref<24xf32, #tpu.memory_space<smem>>
    %95 = vector.broadcast %94 : f32 to vector<8x256xf32>
    %96 = arith.subf %1, %95 : vector<8x256xf32>
    %97 = arith.mulf %96, %96 : vector<8x256xf32>
    %98 = arith.addf %93, %97 : vector<8x256xf32>
    %c17 = arith.constant 17 : index
    %99 = memref.load %arg3[%c17] : memref<24xf32, #tpu.memory_space<smem>>
    %100 = vector.broadcast %99 : f32 to vector<8x256xf32>
    %101 = arith.subf %2, %100 : vector<8x256xf32>
    %102 = arith.mulf %101, %101 : vector<8x256xf32>
    %103 = arith.addf %98, %102 : vector<8x256xf32>
    %104 = arith.cmpf olt, %103, %89 : vector<8x256xf32>
    %c5_i32 = arith.constant 5 : i32
    %105 = vector.broadcast %c5_i32 : i32 to vector<8x256xi32>
    %106 = arith.select %104, %105, %88 : vector<8x256xi1>, vector<8x256xi32>
    %107 = arith.select %104, %103, %89 : vector<8x256xi1>, vector<8x256xf32>
    %c18 = arith.constant 18 : index
    %108 = memref.load %arg3[%c18] : memref<24xf32, #tpu.memory_space<smem>>
    %109 = vector.broadcast %108 : f32 to vector<8x256xf32>
    %110 = arith.subf %0, %109 : vector<8x256xf32>
    %111 = arith.mulf %110, %110 : vector<8x256xf32>
    %c19 = arith.constant 19 : index
    %112 = memref.load %arg3[%c19] : memref<24xf32, #tpu.memory_space<smem>>
    %113 = vector.broadcast %112 : f32 to vector<8x256xf32>
    %114 = arith.subf %1, %113 : vector<8x256xf32>
    %115 = arith.mulf %114, %114 : vector<8x256xf32>
    %116 = arith.addf %111, %115 : vector<8x256xf32>
    %c20 = arith.constant 20 : index
    %117 = memref.load %arg3[%c20] : memref<24xf32, #tpu.memory_space<smem>>
    %118 = vector.broadcast %117 : f32 to vector<8x256xf32>
    %119 = arith.subf %2, %118 : vector<8x256xf32>
    %120 = arith.mulf %119, %119 : vector<8x256xf32>
    %121 = arith.addf %116, %120 : vector<8x256xf32>
    %122 = arith.cmpf olt, %121, %107 : vector<8x256xf32>
    %c6_i32 = arith.constant 6 : i32
    %123 = vector.broadcast %c6_i32 : i32 to vector<8x256xi32>
    %124 = arith.select %122, %123, %106 : vector<8x256xi1>, vector<8x256xi32>
    %125 = arith.select %122, %121, %107 : vector<8x256xi1>, vector<8x256xf32>
    %c21 = arith.constant 21 : index
    %126 = memref.load %arg3[%c21] : memref<24xf32, #tpu.memory_space<smem>>
    %127 = vector.broadcast %126 : f32 to vector<8x256xf32>
    %128 = arith.subf %0, %127 : vector<8x256xf32>
    %129 = arith.mulf %128, %128 : vector<8x256xf32>
    %c22 = arith.constant 22 : index
    %130 = memref.load %arg3[%c22] : memref<24xf32, #tpu.memory_space<smem>>
    %131 = vector.broadcast %130 : f32 to vector<8x256xf32>
    %132 = arith.subf %1, %131 : vector<8x256xf32>
    %133 = arith.mulf %132, %132 : vector<8x256xf32>
    %134 = arith.addf %129, %133 : vector<8x256xf32>
    %c23 = arith.constant 23 : index
    %135 = memref.load %arg3[%c23] : memref<24xf32, #tpu.memory_space<smem>>
    %136 = vector.broadcast %135 : f32 to vector<8x256xf32>
    %137 = arith.subf %2, %136 : vector<8x256xf32>
    %138 = arith.mulf %137, %137 : vector<8x256xf32>
    %139 = arith.addf %134, %138 : vector<8x256xf32>
    %140 = arith.cmpf olt, %139, %125 : vector<8x256xf32>
    %c7_i32 = arith.constant 7 : i32
    %141 = vector.broadcast %c7_i32 : i32 to vector<8x256xi32>
    %142 = arith.select %140, %141, %124 : vector<8x256xi1>, vector<8x256xi32>
    %143 = arith.select %140, %139, %125 : vector<8x256xi1>, vector<8x256xf32>
    %144 = math.sqrt %143 : vector<8x256xf32>
    %cst = arith.constant 1.000000e+00 : f32
    %145 = vector.broadcast %cst : f32 to vector<8x256xf32>
    %146 = arith.mulf %144, %145 : vector<8x256xf32>
    %cst_6 = arith.constant 1.000000e+00 : f32
    %147 = vector.broadcast %cst_6 : f32 to vector<8x256xf32>
    %148 = arith.subf %147, %146 : vector<8x256xf32>
    %cst_7 = arith.constant 0.000000e+00 : f32
    %149 = vector.broadcast %cst_7 : f32 to vector<8x256xf32>
    %150 = arith.maximumf %148, %149 : vector<8x256xf32>
    %c0_8 = arith.constant 0 : index
    %c0_9 = arith.constant 0 : index
    %151 = vector.load %arg2[%c0_8, %c0_9] : memref<128x256xf32, #tpu.memory_space<vmem>>, vector<16x256xf32>
    %152 = vector.extract_strided_slice %150 {offsets = [0, 0], sizes = [1, 256], strides = [1, 1]} : vector<8x256xf32> to vector<1x256xf32>
    %153 = vector.extract_strided_slice %142 {offsets = [0, 0], sizes = [1, 256], strides = [1, 1]} : vector<8x256xi32> to vector<1x256xi32>
    %c0_i32_10 = arith.constant 0 : i32
    %154 = vector.broadcast %c0_i32_10 : i32 to vector<1x256xi32>
    %155 = arith.cmpi eq, %153, %154 : vector<1x256xi32>
    %cst_11 = arith.constant 0.000000e+00 : f32
    %156 = vector.broadcast %cst_11 : f32 to vector<1x256xf32>
    %157 = arith.select %155, %152, %156 : vector<1x256xi1>, vector<1x256xf32>
    %158 = vector.broadcast %157 : vector<1x256xf32> to vector<16x256xf32>
    %159 = arith.mulf %158, %151 : vector<16x256xf32>
    %c1_i32_12 = arith.constant 1 : i32
    %160 = vector.broadcast %c1_i32_12 : i32 to vector<1x256xi32>
    %161 = arith.cmpi eq, %153, %160 : vector<1x256xi32>
    %cst_13 = arith.constant 0.000000e+00 : f32
    %162 = vector.broadcast %cst_13 : f32 to vector<1x256xf32>
    %163 = arith.select %161, %152, %162 : vector<1x256xi1>, vector<1x256xf32>
    %164 = vector.broadcast %163 : vector<1x256xf32> to vector<16x256xf32>
    %165 = arith.mulf %164, %151 : vector<16x256xf32>
    %c2_i32_14 = arith.constant 2 : i32
    %166 = vector.broadcast %c2_i32_14 : i32 to vector<1x256xi32>
    %167 = arith.cmpi eq, %153, %166 : vector<1x256xi32>
    %cst_15 = arith.constant 0.000000e+00 : f32
    %168 = vector.broadcast %cst_15 : f32 to vector<1x256xf32>
    %169 = arith.select %167, %152, %168 : vector<1x256xi1>, vector<1x256xf32>
    %170 = vector.broadcast %169 : vector<1x256xf32> to vector<16x256xf32>
    %171 = arith.mulf %170, %151 : vector<16x256xf32>
    %c3_i32_16 = arith.constant 3 : i32
    %172 = vector.broadcast %c3_i32_16 : i32 to vector<1x256xi32>
    %173 = arith.cmpi eq, %153, %172 : vector<1x256xi32>
    %cst_17 = arith.constant 0.000000e+00 : f32
    %174 = vector.broadcast %cst_17 : f32 to vector<1x256xf32>
    %175 = arith.select %173, %152, %174 : vector<1x256xi1>, vector<1x256xf32>
    %176 = vector.broadcast %175 : vector<1x256xf32> to vector<16x256xf32>
    %177 = arith.mulf %176, %151 : vector<16x256xf32>
    %c4_i32_18 = arith.constant 4 : i32
    %178 = vector.broadcast %c4_i32_18 : i32 to vector<1x256xi32>
    %179 = arith.cmpi eq, %153, %178 : vector<1x256xi32>
    %cst_19 = arith.constant 0.000000e+00 : f32
    %180 = vector.broadcast %cst_19 : f32 to vector<1x256xf32>
    %181 = arith.select %179, %152, %180 : vector<1x256xi1>, vector<1x256xf32>
    %182 = vector.broadcast %181 : vector<1x256xf32> to vector<16x256xf32>
    %183 = arith.mulf %182, %151 : vector<16x256xf32>
    %c5_i32_20 = arith.constant 5 : i32
    %184 = vector.broadcast %c5_i32_20 : i32 to vector<1x256xi32>
    %185 = arith.cmpi eq, %153, %184 : vector<1x256xi32>
    %cst_21 = arith.constant 0.000000e+00 : f32
    %186 = vector.broadcast %cst_21 : f32 to vector<1x256xf32>
    %187 = arith.select %185, %152, %186 : vector<1x256xi1>, vector<1x256xf32>
    %188 = vector.broadcast %187 : vector<1x256xf32> to vector<16x256xf32>
    %189 = arith.mulf %188, %151 : vector<16x256xf32>
    %c6_i32_22 = arith.constant 6 : i32
    %190 = vector.broadcast %c6_i32_22 : i32 to vector<1x256xi32>
    %191 = arith.cmpi eq, %153, %190 : vector<1x256xi32>
    %cst_23 = arith.constant 0.000000e+00 : f32
    %192 = vector.broadcast %cst_23 : f32 to vector<1x256xf32>
    %193 = arith.select %191, %152, %192 : vector<1x256xi1>, vector<1x256xf32>
    %194 = vector.broadcast %193 : vector<1x256xf32> to vector<16x256xf32>
    %195 = arith.mulf %194, %151 : vector<16x256xf32>
    %c7_i32_24 = arith.constant 7 : i32
    %196 = vector.broadcast %c7_i32_24 : i32 to vector<1x256xi32>
    %197 = arith.cmpi eq, %153, %196 : vector<1x256xi32>
    %cst_25 = arith.constant 0.000000e+00 : f32
    %198 = vector.broadcast %cst_25 : f32 to vector<1x256xf32>
    %199 = arith.select %197, %152, %198 : vector<1x256xi1>, vector<1x256xf32>
    %200 = vector.broadcast %199 : vector<1x256xf32> to vector<16x256xf32>
    %201 = arith.mulf %200, %151 : vector<16x256xf32>
    %c16_26 = arith.constant 16 : index
    %c0_27 = arith.constant 0 : index
    %202 = vector.load %arg2[%c16_26, %c0_27] : memref<128x256xf32, #tpu.memory_space<vmem>>, vector<16x256xf32>
    %203 = vector.extract_strided_slice %150 {offsets = [1, 0], sizes = [1, 256], strides = [1, 1]} : vector<8x256xf32> to vector<1x256xf32>
    %204 = vector.extract_strided_slice %142 {offsets = [1, 0], sizes = [1, 256], strides = [1, 1]} : vector<8x256xi32> to vector<1x256xi32>
    %c0_i32_28 = arith.constant 0 : i32
    %205 = vector.broadcast %c0_i32_28 : i32 to vector<1x256xi32>
    %206 = arith.cmpi eq, %204, %205 : vector<1x256xi32>
    %cst_29 = arith.constant 0.000000e+00 : f32
    %207 = vector.broadcast %cst_29 : f32 to vector<1x256xf32>
    %208 = arith.select %206, %203, %207 : vector<1x256xi1>, vector<1x256xf32>
    %209 = vector.broadcast %208 : vector<1x256xf32> to vector<16x256xf32>
    %210 = arith.mulf %209, %202 : vector<16x256xf32>
    %211 = arith.addf %159, %210 : vector<16x256xf32>
    %c1_i32_30 = arith.constant 1 : i32
    %212 = vector.broadcast %c1_i32_30 : i32 to vector<1x256xi32>
    %213 = arith.cmpi eq, %204, %212 : vector<1x256xi32>
    %cst_31 = arith.constant 0.000000e+00 : f32
    %214 = vector.broadcast %cst_31 : f32 to vector<1x256xf32>
    %215 = arith.select %213, %203, %214 : vector<1x256xi1>, vector<1x256xf32>
    %216 = vector.broadcast %215 : vector<1x256xf32> to vector<16x256xf32>
    %217 = arith.mulf %216, %202 : vector<16x256xf32>
    %218 = arith.addf %165, %217 : vector<16x256xf32>
    %c2_i32_32 = arith.constant 2 : i32
    %219 = vector.broadcast %c2_i32_32 : i32 to vector<1x256xi32>
    %220 = arith.cmpi eq, %204, %219 : vector<1x256xi32>
    %cst_33 = arith.constant 0.000000e+00 : f32
    %221 = vector.broadcast %cst_33 : f32 to vector<1x256xf32>
    %222 = arith.select %220, %203, %221 : vector<1x256xi1>, vector<1x256xf32>
    %223 = vector.broadcast %222 : vector<1x256xf32> to vector<16x256xf32>
    %224 = arith.mulf %223, %202 : vector<16x256xf32>
    %225 = arith.addf %171, %224 : vector<16x256xf32>
    %c3_i32_34 = arith.constant 3 : i32
    %226 = vector.broadcast %c3_i32_34 : i32 to vector<1x256xi32>
    %227 = arith.cmpi eq, %204, %226 : vector<1x256xi32>
    %cst_35 = arith.constant 0.000000e+00 : f32
    %228 = vector.broadcast %cst_35 : f32 to vector<1x256xf32>
    %229 = arith.select %227, %203, %228 : vector<1x256xi1>, vector<1x256xf32>
    %230 = vector.broadcast %229 : vector<1x256xf32> to vector<16x256xf32>
    %231 = arith.mulf %230, %202 : vector<16x256xf32>
    %232 = arith.addf %177, %231 : vector<16x256xf32>
    %c4_i32_36 = arith.constant 4 : i32
    %233 = vector.broadcast %c4_i32_36 : i32 to vector<1x256xi32>
    %234 = arith.cmpi eq, %204, %233 : vector<1x256xi32>
    %cst_37 = arith.constant 0.000000e+00 : f32
    %235 = vector.broadcast %cst_37 : f32 to vector<1x256xf32>
    %236 = arith.select %234, %203, %235 : vector<1x256xi1>, vector<1x256xf32>
    %237 = vector.broadcast %236 : vector<1x256xf32> to vector<16x256xf32>
    %238 = arith.mulf %237, %202 : vector<16x256xf32>
    %239 = arith.addf %183, %238 : vector<16x256xf32>
    %c5_i32_38 = arith.constant 5 : i32
    %240 = vector.broadcast %c5_i32_38 : i32 to vector<1x256xi32>
    %241 = arith.cmpi eq, %204, %240 : vector<1x256xi32>
    %cst_39 = arith.constant 0.000000e+00 : f32
    %242 = vector.broadcast %cst_39 : f32 to vector<1x256xf32>
    %243 = arith.select %241, %203, %242 : vector<1x256xi1>, vector<1x256xf32>
    %244 = vector.broadcast %243 : vector<1x256xf32> to vector<16x256xf32>
    %245 = arith.mulf %244, %202 : vector<16x256xf32>
    %246 = arith.addf %189, %245 : vector<16x256xf32>
    %c6_i32_40 = arith.constant 6 : i32
    %247 = vector.broadcast %c6_i32_40 : i32 to vector<1x256xi32>
    %248 = arith.cmpi eq, %204, %247 : vector<1x256xi32>
    %cst_41 = arith.constant 0.000000e+00 : f32
    %249 = vector.broadcast %cst_41 : f32 to vector<1x256xf32>
    %250 = arith.select %248, %203, %249 : vector<1x256xi1>, vector<1x256xf32>
    %251 = vector.broadcast %250 : vector<1x256xf32> to vector<16x256xf32>
    %252 = arith.mulf %251, %202 : vector<16x256xf32>
    %253 = arith.addf %195, %252 : vector<16x256xf32>
    %c7_i32_42 = arith.constant 7 : i32
    %254 = vector.broadcast %c7_i32_42 : i32 to vector<1x256xi32>
    %255 = arith.cmpi eq, %204, %254 : vector<1x256xi32>
    %cst_43 = arith.constant 0.000000e+00 : f32
    %256 = vector.broadcast %cst_43 : f32 to vector<1x256xf32>
    %257 = arith.select %255, %203, %256 : vector<1x256xi1>, vector<1x256xf32>
    %258 = vector.broadcast %257 : vector<1x256xf32> to vector<16x256xf32>
    %259 = arith.mulf %258, %202 : vector<16x256xf32>
    %260 = arith.addf %201, %259 : vector<16x256xf32>
    %c32 = arith.constant 32 : index
    %c0_44 = arith.constant 0 : index
    %261 = vector.load %arg2[%c32, %c0_44] : memref<128x256xf32, #tpu.memory_space<vmem>>, vector<16x256xf32>
    %262 = vector.extract_strided_slice %150 {offsets = [2, 0], sizes = [1, 256], strides = [1, 1]} : vector<8x256xf32> to vector<1x256xf32>
    %263 = vector.extract_strided_slice %142 {offsets = [2, 0], sizes = [1, 256], strides = [1, 1]} : vector<8x256xi32> to vector<1x256xi32>
    %c0_i32_45 = arith.constant 0 : i32
    %264 = vector.broadcast %c0_i32_45 : i32 to vector<1x256xi32>
    %265 = arith.cmpi eq, %263, %264 : vector<1x256xi32>
    %cst_46 = arith.constant 0.000000e+00 : f32
    %266 = vector.broadcast %cst_46 : f32 to vector<1x256xf32>
    %267 = arith.select %265, %262, %266 : vector<1x256xi1>, vector<1x256xf32>
    %268 = vector.broadcast %267 : vector<1x256xf32> to vector<16x256xf32>
    %269 = arith.mulf %268, %261 : vector<16x256xf32>
    %270 = arith.addf %211, %269 : vector<16x256xf32>
    %c1_i32_47 = arith.constant 1 : i32
    %271 = vector.broadcast %c1_i32_47 : i32 to vector<1x256xi32>
    %272 = arith.cmpi eq, %263, %271 : vector<1x256xi32>
    %cst_48 = arith.constant 0.000000e+00 : f32
    %273 = vector.broadcast %cst_48 : f32 to vector<1x256xf32>
    %274 = arith.select %272, %262, %273 : vector<1x256xi1>, vector<1x256xf32>
    %275 = vector.broadcast %274 : vector<1x256xf32> to vector<16x256xf32>
    %276 = arith.mulf %275, %261 : vector<16x256xf32>
    %277 = arith.addf %218, %276 : vector<16x256xf32>
    %c2_i32_49 = arith.constant 2 : i32
    %278 = vector.broadcast %c2_i32_49 : i32 to vector<1x256xi32>
    %279 = arith.cmpi eq, %263, %278 : vector<1x256xi32>
    %cst_50 = arith.constant 0.000000e+00 : f32
    %280 = vector.broadcast %cst_50 : f32 to vector<1x256xf32>
    %281 = arith.select %279, %262, %280 : vector<1x256xi1>, vector<1x256xf32>
    %282 = vector.broadcast %281 : vector<1x256xf32> to vector<16x256xf32>
    %283 = arith.mulf %282, %261 : vector<16x256xf32>
    %284 = arith.addf %225, %283 : vector<16x256xf32>
    %c3_i32_51 = arith.constant 3 : i32
    %285 = vector.broadcast %c3_i32_51 : i32 to vector<1x256xi32>
    %286 = arith.cmpi eq, %263, %285 : vector<1x256xi32>
    %cst_52 = arith.constant 0.000000e+00 : f32
    %287 = vector.broadcast %cst_52 : f32 to vector<1x256xf32>
    %288 = arith.select %286, %262, %287 : vector<1x256xi1>, vector<1x256xf32>
    %289 = vector.broadcast %288 : vector<1x256xf32> to vector<16x256xf32>
    %290 = arith.mulf %289, %261 : vector<16x256xf32>
    %291 = arith.addf %232, %290 : vector<16x256xf32>
    %c4_i32_53 = arith.constant 4 : i32
    %292 = vector.broadcast %c4_i32_53 : i32 to vector<1x256xi32>
    %293 = arith.cmpi eq, %263, %292 : vector<1x256xi32>
    %cst_54 = arith.constant 0.000000e+00 : f32
    %294 = vector.broadcast %cst_54 : f32 to vector<1x256xf32>
    %295 = arith.select %293, %262, %294 : vector<1x256xi1>, vector<1x256xf32>
    %296 = vector.broadcast %295 : vector<1x256xf32> to vector<16x256xf32>
    %297 = arith.mulf %296, %261 : vector<16x256xf32>
    %298 = arith.addf %239, %297 : vector<16x256xf32>
    %c5_i32_55 = arith.constant 5 : i32
    %299 = vector.broadcast %c5_i32_55 : i32 to vector<1x256xi32>
    %300 = arith.cmpi eq, %263, %299 : vector<1x256xi32>
    %cst_56 = arith.constant 0.000000e+00 : f32
    %301 = vector.broadcast %cst_56 : f32 to vector<1x256xf32>
    %302 = arith.select %300, %262, %301 : vector<1x256xi1>, vector<1x256xf32>
    %303 = vector.broadcast %302 : vector<1x256xf32> to vector<16x256xf32>
    %304 = arith.mulf %303, %261 : vector<16x256xf32>
    %305 = arith.addf %246, %304 : vector<16x256xf32>
    %c6_i32_57 = arith.constant 6 : i32
    %306 = vector.broadcast %c6_i32_57 : i32 to vector<1x256xi32>
    %307 = arith.cmpi eq, %263, %306 : vector<1x256xi32>
    %cst_58 = arith.constant 0.000000e+00 : f32
    %308 = vector.broadcast %cst_58 : f32 to vector<1x256xf32>
    %309 = arith.select %307, %262, %308 : vector<1x256xi1>, vector<1x256xf32>
    %310 = vector.broadcast %309 : vector<1x256xf32> to vector<16x256xf32>
    %311 = arith.mulf %310, %261 : vector<16x256xf32>
    %312 = arith.addf %253, %311 : vector<16x256xf32>
    %c7_i32_59 = arith.constant 7 : i32
    %313 = vector.broadcast %c7_i32_59 : i32 to vector<1x256xi32>
    %314 = arith.cmpi eq, %263, %313 : vector<1x256xi32>
    %cst_60 = arith.constant 0.000000e+00 : f32
    %315 = vector.broadcast %cst_60 : f32 to vector<1x256xf32>
    %316 = arith.select %314, %262, %315 : vector<1x256xi1>, vector<1x256xf32>
    %317 = vector.broadcast %316 : vector<1x256xf32> to vector<16x256xf32>
    %318 = arith.mulf %317, %261 : vector<16x256xf32>
    %319 = arith.addf %260, %318 : vector<16x256xf32>
    %c48 = arith.constant 48 : index
    %c0_61 = arith.constant 0 : index
    %320 = vector.load %arg2[%c48, %c0_61] : memref<128x256xf32, #tpu.memory_space<vmem>>, vector<16x256xf32>
    %321 = vector.extract_strided_slice %150 {offsets = [3, 0], sizes = [1, 256], strides = [1, 1]} : vector<8x256xf32> to vector<1x256xf32>
    %322 = vector.extract_strided_slice %142 {offsets = [3, 0], sizes = [1, 256], strides = [1, 1]} : vector<8x256xi32> to vector<1x256xi32>
    %c0_i32_62 = arith.constant 0 : i32
    %323 = vector.broadcast %c0_i32_62 : i32 to vector<1x256xi32>
    %324 = arith.cmpi eq, %322, %323 : vector<1x256xi32>
    %cst_63 = arith.constant 0.000000e+00 : f32
    %325 = vector.broadcast %cst_63 : f32 to vector<1x256xf32>
    %326 = arith.select %324, %321, %325 : vector<1x256xi1>, vector<1x256xf32>
    %327 = vector.broadcast %326 : vector<1x256xf32> to vector<16x256xf32>
    %328 = arith.mulf %327, %320 : vector<16x256xf32>
    %329 = arith.addf %270, %328 : vector<16x256xf32>
    %c1_i32_64 = arith.constant 1 : i32
    %330 = vector.broadcast %c1_i32_64 : i32 to vector<1x256xi32>
    %331 = arith.cmpi eq, %322, %330 : vector<1x256xi32>
    %cst_65 = arith.constant 0.000000e+00 : f32
    %332 = vector.broadcast %cst_65 : f32 to vector<1x256xf32>
    %333 = arith.select %331, %321, %332 : vector<1x256xi1>, vector<1x256xf32>
    %334 = vector.broadcast %333 : vector<1x256xf32> to vector<16x256xf32>
    %335 = arith.mulf %334, %320 : vector<16x256xf32>
    %336 = arith.addf %277, %335 : vector<16x256xf32>
    %c2_i32_66 = arith.constant 2 : i32
    %337 = vector.broadcast %c2_i32_66 : i32 to vector<1x256xi32>
    %338 = arith.cmpi eq, %322, %337 : vector<1x256xi32>
    %cst_67 = arith.constant 0.000000e+00 : f32
    %339 = vector.broadcast %cst_67 : f32 to vector<1x256xf32>
    %340 = arith.select %338, %321, %339 : vector<1x256xi1>, vector<1x256xf32>
    %341 = vector.broadcast %340 : vector<1x256xf32> to vector<16x256xf32>
    %342 = arith.mulf %341, %320 : vector<16x256xf32>
    %343 = arith.addf %284, %342 : vector<16x256xf32>
    %c3_i32_68 = arith.constant 3 : i32
    %344 = vector.broadcast %c3_i32_68 : i32 to vector<1x256xi32>
    %345 = arith.cmpi eq, %322, %344 : vector<1x256xi32>
    %cst_69 = arith.constant 0.000000e+00 : f32
    %346 = vector.broadcast %cst_69 : f32 to vector<1x256xf32>
    %347 = arith.select %345, %321, %346 : vector<1x256xi1>, vector<1x256xf32>
    %348 = vector.broadcast %347 : vector<1x256xf32> to vector<16x256xf32>
    %349 = arith.mulf %348, %320 : vector<16x256xf32>
    %350 = arith.addf %291, %349 : vector<16x256xf32>
    %c4_i32_70 = arith.constant 4 : i32
    %351 = vector.broadcast %c4_i32_70 : i32 to vector<1x256xi32>
    %352 = arith.cmpi eq, %322, %351 : vector<1x256xi32>
    %cst_71 = arith.constant 0.000000e+00 : f32
    %353 = vector.broadcast %cst_71 : f32 to vector<1x256xf32>
    %354 = arith.select %352, %321, %353 : vector<1x256xi1>, vector<1x256xf32>
    %355 = vector.broadcast %354 : vector<1x256xf32> to vector<16x256xf32>
    %356 = arith.mulf %355, %320 : vector<16x256xf32>
    %357 = arith.addf %298, %356 : vector<16x256xf32>
    %c5_i32_72 = arith.constant 5 : i32
    %358 = vector.broadcast %c5_i32_72 : i32 to vector<1x256xi32>
    %359 = arith.cmpi eq, %322, %358 : vector<1x256xi32>
    %cst_73 = arith.constant 0.000000e+00 : f32
    %360 = vector.broadcast %cst_73 : f32 to vector<1x256xf32>
    %361 = arith.select %359, %321, %360 : vector<1x256xi1>, vector<1x256xf32>
    %362 = vector.broadcast %361 : vector<1x256xf32> to vector<16x256xf32>
    %363 = arith.mulf %362, %320 : vector<16x256xf32>
    %364 = arith.addf %305, %363 : vector<16x256xf32>
    %c6_i32_74 = arith.constant 6 : i32
    %365 = vector.broadcast %c6_i32_74 : i32 to vector<1x256xi32>
    %366 = arith.cmpi eq, %322, %365 : vector<1x256xi32>
    %cst_75 = arith.constant 0.000000e+00 : f32
    %367 = vector.broadcast %cst_75 : f32 to vector<1x256xf32>
    %368 = arith.select %366, %321, %367 : vector<1x256xi1>, vector<1x256xf32>
    %369 = vector.broadcast %368 : vector<1x256xf32> to vector<16x256xf32>
    %370 = arith.mulf %369, %320 : vector<16x256xf32>
    %371 = arith.addf %312, %370 : vector<16x256xf32>
    %c7_i32_76 = arith.constant 7 : i32
    %372 = vector.broadcast %c7_i32_76 : i32 to vector<1x256xi32>
    %373 = arith.cmpi eq, %322, %372 : vector<1x256xi32>
    %cst_77 = arith.constant 0.000000e+00 : f32
    %374 = vector.broadcast %cst_77 : f32 to vector<1x256xf32>
    %375 = arith.select %373, %321, %374 : vector<1x256xi1>, vector<1x256xf32>
    %376 = vector.broadcast %375 : vector<1x256xf32> to vector<16x256xf32>
    %377 = arith.mulf %376, %320 : vector<16x256xf32>
    %378 = arith.addf %319, %377 : vector<16x256xf32>
    %c64 = arith.constant 64 : index
    %c0_78 = arith.constant 0 : index
    %379 = vector.load %arg2[%c64, %c0_78] : memref<128x256xf32, #tpu.memory_space<vmem>>, vector<16x256xf32>
    %380 = vector.extract_strided_slice %150 {offsets = [4, 0], sizes = [1, 256], strides = [1, 1]} : vector<8x256xf32> to vector<1x256xf32>
    %381 = vector.extract_strided_slice %142 {offsets = [4, 0], sizes = [1, 256], strides = [1, 1]} : vector<8x256xi32> to vector<1x256xi32>
    %c0_i32_79 = arith.constant 0 : i32
    %382 = vector.broadcast %c0_i32_79 : i32 to vector<1x256xi32>
    %383 = arith.cmpi eq, %381, %382 : vector<1x256xi32>
    %cst_80 = arith.constant 0.000000e+00 : f32
    %384 = vector.broadcast %cst_80 : f32 to vector<1x256xf32>
    %385 = arith.select %383, %380, %384 : vector<1x256xi1>, vector<1x256xf32>
    %386 = vector.broadcast %385 : vector<1x256xf32> to vector<16x256xf32>
    %387 = arith.mulf %386, %379 : vector<16x256xf32>
    %388 = arith.addf %329, %387 : vector<16x256xf32>
    %c1_i32_81 = arith.constant 1 : i32
    %389 = vector.broadcast %c1_i32_81 : i32 to vector<1x256xi32>
    %390 = arith.cmpi eq, %381, %389 : vector<1x256xi32>
    %cst_82 = arith.constant 0.000000e+00 : f32
    %391 = vector.broadcast %cst_82 : f32 to vector<1x256xf32>
    %392 = arith.select %390, %380, %391 : vector<1x256xi1>, vector<1x256xf32>
    %393 = vector.broadcast %392 : vector<1x256xf32> to vector<16x256xf32>
    %394 = arith.mulf %393, %379 : vector<16x256xf32>
    %395 = arith.addf %336, %394 : vector<16x256xf32>
    %c2_i32_83 = arith.constant 2 : i32
    %396 = vector.broadcast %c2_i32_83 : i32 to vector<1x256xi32>
    %397 = arith.cmpi eq, %381, %396 : vector<1x256xi32>
    %cst_84 = arith.constant 0.000000e+00 : f32
    %398 = vector.broadcast %cst_84 : f32 to vector<1x256xf32>
    %399 = arith.select %397, %380, %398 : vector<1x256xi1>, vector<1x256xf32>
    %400 = vector.broadcast %399 : vector<1x256xf32> to vector<16x256xf32>
    %401 = arith.mulf %400, %379 : vector<16x256xf32>
    %402 = arith.addf %343, %401 : vector<16x256xf32>
    %c3_i32_85 = arith.constant 3 : i32
    %403 = vector.broadcast %c3_i32_85 : i32 to vector<1x256xi32>
    %404 = arith.cmpi eq, %381, %403 : vector<1x256xi32>
    %cst_86 = arith.constant 0.000000e+00 : f32
    %405 = vector.broadcast %cst_86 : f32 to vector<1x256xf32>
    %406 = arith.select %404, %380, %405 : vector<1x256xi1>, vector<1x256xf32>
    %407 = vector.broadcast %406 : vector<1x256xf32> to vector<16x256xf32>
    %408 = arith.mulf %407, %379 : vector<16x256xf32>
    %409 = arith.addf %350, %408 : vector<16x256xf32>
    %c4_i32_87 = arith.constant 4 : i32
    %410 = vector.broadcast %c4_i32_87 : i32 to vector<1x256xi32>
    %411 = arith.cmpi eq, %381, %410 : vector<1x256xi32>
    %cst_88 = arith.constant 0.000000e+00 : f32
    %412 = vector.broadcast %cst_88 : f32 to vector<1x256xf32>
    %413 = arith.select %411, %380, %412 : vector<1x256xi1>, vector<1x256xf32>
    %414 = vector.broadcast %413 : vector<1x256xf32> to vector<16x256xf32>
    %415 = arith.mulf %414, %379 : vector<16x256xf32>
    %416 = arith.addf %357, %415 : vector<16x256xf32>
    %c5_i32_89 = arith.constant 5 : i32
    %417 = vector.broadcast %c5_i32_89 : i32 to vector<1x256xi32>
    %418 = arith.cmpi eq, %381, %417 : vector<1x256xi32>
    %cst_90 = arith.constant 0.000000e+00 : f32
    %419 = vector.broadcast %cst_90 : f32 to vector<1x256xf32>
    %420 = arith.select %418, %380, %419 : vector<1x256xi1>, vector<1x256xf32>
    %421 = vector.broadcast %420 : vector<1x256xf32> to vector<16x256xf32>
    %422 = arith.mulf %421, %379 : vector<16x256xf32>
    %423 = arith.addf %364, %422 : vector<16x256xf32>
    %c6_i32_91 = arith.constant 6 : i32
    %424 = vector.broadcast %c6_i32_91 : i32 to vector<1x256xi32>
    %425 = arith.cmpi eq, %381, %424 : vector<1x256xi32>
    %cst_92 = arith.constant 0.000000e+00 : f32
    %426 = vector.broadcast %cst_92 : f32 to vector<1x256xf32>
    %427 = arith.select %425, %380, %426 : vector<1x256xi1>, vector<1x256xf32>
    %428 = vector.broadcast %427 : vector<1x256xf32> to vector<16x256xf32>
    %429 = arith.mulf %428, %379 : vector<16x256xf32>
    %430 = arith.addf %371, %429 : vector<16x256xf32>
    %c7_i32_93 = arith.constant 7 : i32
    %431 = vector.broadcast %c7_i32_93 : i32 to vector<1x256xi32>
    %432 = arith.cmpi eq, %381, %431 : vector<1x256xi32>
    %cst_94 = arith.constant 0.000000e+00 : f32
    %433 = vector.broadcast %cst_94 : f32 to vector<1x256xf32>
    %434 = arith.select %432, %380, %433 : vector<1x256xi1>, vector<1x256xf32>
    %435 = vector.broadcast %434 : vector<1x256xf32> to vector<16x256xf32>
    %436 = arith.mulf %435, %379 : vector<16x256xf32>
    %437 = arith.addf %378, %436 : vector<16x256xf32>
    %c80 = arith.constant 80 : index
    %c0_95 = arith.constant 0 : index
    %438 = vector.load %arg2[%c80, %c0_95] : memref<128x256xf32, #tpu.memory_space<vmem>>, vector<16x256xf32>
    %439 = vector.extract_strided_slice %150 {offsets = [5, 0], sizes = [1, 256], strides = [1, 1]} : vector<8x256xf32> to vector<1x256xf32>
    %440 = vector.extract_strided_slice %142 {offsets = [5, 0], sizes = [1, 256], strides = [1, 1]} : vector<8x256xi32> to vector<1x256xi32>
    %c0_i32_96 = arith.constant 0 : i32
    %441 = vector.broadcast %c0_i32_96 : i32 to vector<1x256xi32>
    %442 = arith.cmpi eq, %440, %441 : vector<1x256xi32>
    %cst_97 = arith.constant 0.000000e+00 : f32
    %443 = vector.broadcast %cst_97 : f32 to vector<1x256xf32>
    %444 = arith.select %442, %439, %443 : vector<1x256xi1>, vector<1x256xf32>
    %445 = vector.broadcast %444 : vector<1x256xf32> to vector<16x256xf32>
    %446 = arith.mulf %445, %438 : vector<16x256xf32>
    %447 = arith.addf %388, %446 : vector<16x256xf32>
    %c1_i32_98 = arith.constant 1 : i32
    %448 = vector.broadcast %c1_i32_98 : i32 to vector<1x256xi32>
    %449 = arith.cmpi eq, %440, %448 : vector<1x256xi32>
    %cst_99 = arith.constant 0.000000e+00 : f32
    %450 = vector.broadcast %cst_99 : f32 to vector<1x256xf32>
    %451 = arith.select %449, %439, %450 : vector<1x256xi1>, vector<1x256xf32>
    %452 = vector.broadcast %451 : vector<1x256xf32> to vector<16x256xf32>
    %453 = arith.mulf %452, %438 : vector<16x256xf32>
    %454 = arith.addf %395, %453 : vector<16x256xf32>
    %c2_i32_100 = arith.constant 2 : i32
    %455 = vector.broadcast %c2_i32_100 : i32 to vector<1x256xi32>
    %456 = arith.cmpi eq, %440, %455 : vector<1x256xi32>
    %cst_101 = arith.constant 0.000000e+00 : f32
    %457 = vector.broadcast %cst_101 : f32 to vector<1x256xf32>
    %458 = arith.select %456, %439, %457 : vector<1x256xi1>, vector<1x256xf32>
    %459 = vector.broadcast %458 : vector<1x256xf32> to vector<16x256xf32>
    %460 = arith.mulf %459, %438 : vector<16x256xf32>
    %461 = arith.addf %402, %460 : vector<16x256xf32>
    %c3_i32_102 = arith.constant 3 : i32
    %462 = vector.broadcast %c3_i32_102 : i32 to vector<1x256xi32>
    %463 = arith.cmpi eq, %440, %462 : vector<1x256xi32>
    %cst_103 = arith.constant 0.000000e+00 : f32
    %464 = vector.broadcast %cst_103 : f32 to vector<1x256xf32>
    %465 = arith.select %463, %439, %464 : vector<1x256xi1>, vector<1x256xf32>
    %466 = vector.broadcast %465 : vector<1x256xf32> to vector<16x256xf32>
    %467 = arith.mulf %466, %438 : vector<16x256xf32>
    %468 = arith.addf %409, %467 : vector<16x256xf32>
    %c4_i32_104 = arith.constant 4 : i32
    %469 = vector.broadcast %c4_i32_104 : i32 to vector<1x256xi32>
    %470 = arith.cmpi eq, %440, %469 : vector<1x256xi32>
    %cst_105 = arith.constant 0.000000e+00 : f32
    %471 = vector.broadcast %cst_105 : f32 to vector<1x256xf32>
    %472 = arith.select %470, %439, %471 : vector<1x256xi1>, vector<1x256xf32>
    %473 = vector.broadcast %472 : vector<1x256xf32> to vector<16x256xf32>
    %474 = arith.mulf %473, %438 : vector<16x256xf32>
    %475 = arith.addf %416, %474 : vector<16x256xf32>
    %c5_i32_106 = arith.constant 5 : i32
    %476 = vector.broadcast %c5_i32_106 : i32 to vector<1x256xi32>
    %477 = arith.cmpi eq, %440, %476 : vector<1x256xi32>
    %cst_107 = arith.constant 0.000000e+00 : f32
    %478 = vector.broadcast %cst_107 : f32 to vector<1x256xf32>
    %479 = arith.select %477, %439, %478 : vector<1x256xi1>, vector<1x256xf32>
    %480 = vector.broadcast %479 : vector<1x256xf32> to vector<16x256xf32>
    %481 = arith.mulf %480, %438 : vector<16x256xf32>
    %482 = arith.addf %423, %481 : vector<16x256xf32>
    %c6_i32_108 = arith.constant 6 : i32
    %483 = vector.broadcast %c6_i32_108 : i32 to vector<1x256xi32>
    %484 = arith.cmpi eq, %440, %483 : vector<1x256xi32>
    %cst_109 = arith.constant 0.000000e+00 : f32
    %485 = vector.broadcast %cst_109 : f32 to vector<1x256xf32>
    %486 = arith.select %484, %439, %485 : vector<1x256xi1>, vector<1x256xf32>
    %487 = vector.broadcast %486 : vector<1x256xf32> to vector<16x256xf32>
    %488 = arith.mulf %487, %438 : vector<16x256xf32>
    %489 = arith.addf %430, %488 : vector<16x256xf32>
    %c7_i32_110 = arith.constant 7 : i32
    %490 = vector.broadcast %c7_i32_110 : i32 to vector<1x256xi32>
    %491 = arith.cmpi eq, %440, %490 : vector<1x256xi32>
    %cst_111 = arith.constant 0.000000e+00 : f32
    %492 = vector.broadcast %cst_111 : f32 to vector<1x256xf32>
    %493 = arith.select %491, %439, %492 : vector<1x256xi1>, vector<1x256xf32>
    %494 = vector.broadcast %493 : vector<1x256xf32> to vector<16x256xf32>
    %495 = arith.mulf %494, %438 : vector<16x256xf32>
    %496 = arith.addf %437, %495 : vector<16x256xf32>
    %c96 = arith.constant 96 : index
    %c0_112 = arith.constant 0 : index
    %497 = vector.load %arg2[%c96, %c0_112] : memref<128x256xf32, #tpu.memory_space<vmem>>, vector<16x256xf32>
    %498 = vector.extract_strided_slice %150 {offsets = [6, 0], sizes = [1, 256], strides = [1, 1]} : vector<8x256xf32> to vector<1x256xf32>
    %499 = vector.extract_strided_slice %142 {offsets = [6, 0], sizes = [1, 256], strides = [1, 1]} : vector<8x256xi32> to vector<1x256xi32>
    %c0_i32_113 = arith.constant 0 : i32
    %500 = vector.broadcast %c0_i32_113 : i32 to vector<1x256xi32>
    %501 = arith.cmpi eq, %499, %500 : vector<1x256xi32>
    %cst_114 = arith.constant 0.000000e+00 : f32
    %502 = vector.broadcast %cst_114 : f32 to vector<1x256xf32>
    %503 = arith.select %501, %498, %502 : vector<1x256xi1>, vector<1x256xf32>
    %504 = vector.broadcast %503 : vector<1x256xf32> to vector<16x256xf32>
    %505 = arith.mulf %504, %497 : vector<16x256xf32>
    %506 = arith.addf %447, %505 : vector<16x256xf32>
    %c1_i32_115 = arith.constant 1 : i32
    %507 = vector.broadcast %c1_i32_115 : i32 to vector<1x256xi32>
    %508 = arith.cmpi eq, %499, %507 : vector<1x256xi32>
    %cst_116 = arith.constant 0.000000e+00 : f32
    %509 = vector.broadcast %cst_116 : f32 to vector<1x256xf32>
    %510 = arith.select %508, %498, %509 : vector<1x256xi1>, vector<1x256xf32>
    %511 = vector.broadcast %510 : vector<1x256xf32> to vector<16x256xf32>
    %512 = arith.mulf %511, %497 : vector<16x256xf32>
    %513 = arith.addf %454, %512 : vector<16x256xf32>
    %c2_i32_117 = arith.constant 2 : i32
    %514 = vector.broadcast %c2_i32_117 : i32 to vector<1x256xi32>
    %515 = arith.cmpi eq, %499, %514 : vector<1x256xi32>
    %cst_118 = arith.constant 0.000000e+00 : f32
    %516 = vector.broadcast %cst_118 : f32 to vector<1x256xf32>
    %517 = arith.select %515, %498, %516 : vector<1x256xi1>, vector<1x256xf32>
    %518 = vector.broadcast %517 : vector<1x256xf32> to vector<16x256xf32>
    %519 = arith.mulf %518, %497 : vector<16x256xf32>
    %520 = arith.addf %461, %519 : vector<16x256xf32>
    %c3_i32_119 = arith.constant 3 : i32
    %521 = vector.broadcast %c3_i32_119 : i32 to vector<1x256xi32>
    %522 = arith.cmpi eq, %499, %521 : vector<1x256xi32>
    %cst_120 = arith.constant 0.000000e+00 : f32
    %523 = vector.broadcast %cst_120 : f32 to vector<1x256xf32>
    %524 = arith.select %522, %498, %523 : vector<1x256xi1>, vector<1x256xf32>
    %525 = vector.broadcast %524 : vector<1x256xf32> to vector<16x256xf32>
    %526 = arith.mulf %525, %497 : vector<16x256xf32>
    %527 = arith.addf %468, %526 : vector<16x256xf32>
    %c4_i32_121 = arith.constant 4 : i32
    %528 = vector.broadcast %c4_i32_121 : i32 to vector<1x256xi32>
    %529 = arith.cmpi eq, %499, %528 : vector<1x256xi32>
    %cst_122 = arith.constant 0.000000e+00 : f32
    %530 = vector.broadcast %cst_122 : f32 to vector<1x256xf32>
    %531 = arith.select %529, %498, %530 : vector<1x256xi1>, vector<1x256xf32>
    %532 = vector.broadcast %531 : vector<1x256xf32> to vector<16x256xf32>
    %533 = arith.mulf %532, %497 : vector<16x256xf32>
    %534 = arith.addf %475, %533 : vector<16x256xf32>
    %c5_i32_123 = arith.constant 5 : i32
    %535 = vector.broadcast %c5_i32_123 : i32 to vector<1x256xi32>
    %536 = arith.cmpi eq, %499, %535 : vector<1x256xi32>
    %cst_124 = arith.constant 0.000000e+00 : f32
    %537 = vector.broadcast %cst_124 : f32 to vector<1x256xf32>
    %538 = arith.select %536, %498, %537 : vector<1x256xi1>, vector<1x256xf32>
    %539 = vector.broadcast %538 : vector<1x256xf32> to vector<16x256xf32>
    %540 = arith.mulf %539, %497 : vector<16x256xf32>
    %541 = arith.addf %482, %540 : vector<16x256xf32>
    %c6_i32_125 = arith.constant 6 : i32
    %542 = vector.broadcast %c6_i32_125 : i32 to vector<1x256xi32>
    %543 = arith.cmpi eq, %499, %542 : vector<1x256xi32>
    %cst_126 = arith.constant 0.000000e+00 : f32
    %544 = vector.broadcast %cst_126 : f32 to vector<1x256xf32>
    %545 = arith.select %543, %498, %544 : vector<1x256xi1>, vector<1x256xf32>
    %546 = vector.broadcast %545 : vector<1x256xf32> to vector<16x256xf32>
    %547 = arith.mulf %546, %497 : vector<16x256xf32>
    %548 = arith.addf %489, %547 : vector<16x256xf32>
    %c7_i32_127 = arith.constant 7 : i32
    %549 = vector.broadcast %c7_i32_127 : i32 to vector<1x256xi32>
    %550 = arith.cmpi eq, %499, %549 : vector<1x256xi32>
    %cst_128 = arith.constant 0.000000e+00 : f32
    %551 = vector.broadcast %cst_128 : f32 to vector<1x256xf32>
    %552 = arith.select %550, %498, %551 : vector<1x256xi1>, vector<1x256xf32>
    %553 = vector.broadcast %552 : vector<1x256xf32> to vector<16x256xf32>
    %554 = arith.mulf %553, %497 : vector<16x256xf32>
    %555 = arith.addf %496, %554 : vector<16x256xf32>
    %c112 = arith.constant 112 : index
    %c0_129 = arith.constant 0 : index
    %556 = vector.load %arg2[%c112, %c0_129] : memref<128x256xf32, #tpu.memory_space<vmem>>, vector<16x256xf32>
    %557 = vector.extract_strided_slice %150 {offsets = [7, 0], sizes = [1, 256], strides = [1, 1]} : vector<8x256xf32> to vector<1x256xf32>
    %558 = vector.extract_strided_slice %142 {offsets = [7, 0], sizes = [1, 256], strides = [1, 1]} : vector<8x256xi32> to vector<1x256xi32>
    %c0_i32_130 = arith.constant 0 : i32
    %559 = vector.broadcast %c0_i32_130 : i32 to vector<1x256xi32>
    %560 = arith.cmpi eq, %558, %559 : vector<1x256xi32>
    %cst_131 = arith.constant 0.000000e+00 : f32
    %561 = vector.broadcast %cst_131 : f32 to vector<1x256xf32>
    %562 = arith.select %560, %557, %561 : vector<1x256xi1>, vector<1x256xf32>
    %563 = vector.broadcast %562 : vector<1x256xf32> to vector<16x256xf32>
    %564 = arith.mulf %563, %556 : vector<16x256xf32>
    %565 = arith.addf %506, %564 : vector<16x256xf32>
    %c1_i32_132 = arith.constant 1 : i32
    %566 = vector.broadcast %c1_i32_132 : i32 to vector<1x256xi32>
    %567 = arith.cmpi eq, %558, %566 : vector<1x256xi32>
    %cst_133 = arith.constant 0.000000e+00 : f32
    %568 = vector.broadcast %cst_133 : f32 to vector<1x256xf32>
    %569 = arith.select %567, %557, %568 : vector<1x256xi1>, vector<1x256xf32>
    %570 = vector.broadcast %569 : vector<1x256xf32> to vector<16x256xf32>
    %571 = arith.mulf %570, %556 : vector<16x256xf32>
    %572 = arith.addf %513, %571 : vector<16x256xf32>
    %c2_i32_134 = arith.constant 2 : i32
    %573 = vector.broadcast %c2_i32_134 : i32 to vector<1x256xi32>
    %574 = arith.cmpi eq, %558, %573 : vector<1x256xi32>
    %cst_135 = arith.constant 0.000000e+00 : f32
    %575 = vector.broadcast %cst_135 : f32 to vector<1x256xf32>
    %576 = arith.select %574, %557, %575 : vector<1x256xi1>, vector<1x256xf32>
    %577 = vector.broadcast %576 : vector<1x256xf32> to vector<16x256xf32>
    %578 = arith.mulf %577, %556 : vector<16x256xf32>
    %579 = arith.addf %520, %578 : vector<16x256xf32>
    %c3_i32_136 = arith.constant 3 : i32
    %580 = vector.broadcast %c3_i32_136 : i32 to vector<1x256xi32>
    %581 = arith.cmpi eq, %558, %580 : vector<1x256xi32>
    %cst_137 = arith.constant 0.000000e+00 : f32
    %582 = vector.broadcast %cst_137 : f32 to vector<1x256xf32>
    %583 = arith.select %581, %557, %582 : vector<1x256xi1>, vector<1x256xf32>
    %584 = vector.broadcast %583 : vector<1x256xf32> to vector<16x256xf32>
    %585 = arith.mulf %584, %556 : vector<16x256xf32>
    %586 = arith.addf %527, %585 : vector<16x256xf32>
    %c4_i32_138 = arith.constant 4 : i32
    %587 = vector.broadcast %c4_i32_138 : i32 to vector<1x256xi32>
    %588 = arith.cmpi eq, %558, %587 : vector<1x256xi32>
    %cst_139 = arith.constant 0.000000e+00 : f32
    %589 = vector.broadcast %cst_139 : f32 to vector<1x256xf32>
    %590 = arith.select %588, %557, %589 : vector<1x256xi1>, vector<1x256xf32>
    %591 = vector.broadcast %590 : vector<1x256xf32> to vector<16x256xf32>
    %592 = arith.mulf %591, %556 : vector<16x256xf32>
    %593 = arith.addf %534, %592 : vector<16x256xf32>
    %c5_i32_140 = arith.constant 5 : i32
    %594 = vector.broadcast %c5_i32_140 : i32 to vector<1x256xi32>
    %595 = arith.cmpi eq, %558, %594 : vector<1x256xi32>
    %cst_141 = arith.constant 0.000000e+00 : f32
    %596 = vector.broadcast %cst_141 : f32 to vector<1x256xf32>
    %597 = arith.select %595, %557, %596 : vector<1x256xi1>, vector<1x256xf32>
    %598 = vector.broadcast %597 : vector<1x256xf32> to vector<16x256xf32>
    %599 = arith.mulf %598, %556 : vector<16x256xf32>
    %600 = arith.addf %541, %599 : vector<16x256xf32>
    %c6_i32_142 = arith.constant 6 : i32
    %601 = vector.broadcast %c6_i32_142 : i32 to vector<1x256xi32>
    %602 = arith.cmpi eq, %558, %601 : vector<1x256xi32>
    %cst_143 = arith.constant 0.000000e+00 : f32
    %603 = vector.broadcast %cst_143 : f32 to vector<1x256xf32>
    %604 = arith.select %602, %557, %603 : vector<1x256xi1>, vector<1x256xf32>
    %605 = vector.broadcast %604 : vector<1x256xf32> to vector<16x256xf32>
    %606 = arith.mulf %605, %556 : vector<16x256xf32>
    %607 = arith.addf %548, %606 : vector<16x256xf32>
    %c7_i32_144 = arith.constant 7 : i32
    %608 = vector.broadcast %c7_i32_144 : i32 to vector<1x256xi32>
    %609 = arith.cmpi eq, %558, %608 : vector<1x256xi32>
    %cst_145 = arith.constant 0.000000e+00 : f32
    %610 = vector.broadcast %cst_145 : f32 to vector<1x256xf32>
    %611 = arith.select %609, %557, %610 : vector<1x256xi1>, vector<1x256xf32>
    %612 = vector.broadcast %611 : vector<1x256xf32> to vector<16x256xf32>
    %613 = arith.mulf %612, %556 : vector<16x256xf32>
    %614 = arith.addf %555, %613 : vector<16x256xf32>
    %615 = tpu.concatenate %565, %572, %579, %586, %593, %600, %607, %614 in 0 : vector<16x256xf32>, vector<16x256xf32>, vector<16x256xf32>, vector<16x256xf32>, vector<16x256xf32>, vector<16x256xf32>, vector<16x256xf32>, vector<16x256xf32> -> vector<128x256xf32>
    %c0_146 = arith.constant 0 : index
    %c0_147 = arith.constant 0 : index
    %616 = vector.load %arg4[%c0_146, %c0_147] : memref<32x128xf32, #tpu.memory_space<vmem>>, vector<32x128xf32>
    %cst_148 = arith.constant dense<0.000000e+00> : vector<32x256xf32>
    %617 = tpu.matmul %616, %615, %cst_148 {dimension_numbers = #tpu.dot_dimension_numbers<[1], [0], [0], [1], [0, 0, 1, 1], [], []>} : vector<32x128xf32>, vector<128x256xf32>, vector<32x256xf32> -> vector<32x256xf32>
    %c0_149 = arith.constant 0 : index
    %c0_150 = arith.constant 0 : index
    %618 = vector.load %arg5[%c0_149, %c0_150] : memref<32x256xf32, #tpu.memory_space<vmem>>, vector<32x256xf32>
    tpu.vector_store %arg5[%c0_149, %c0_150], %617 {strides = array<i32>} : memref<32x256xf32, #tpu.memory_space<vmem>>, vector<32x256xf32>,
    return
  }
  func.func @transform_0(%arg0: i32) -> (i32, i32) {
    %c0_i32 = arith.constant 0 : i32
    %c0_i32_0 = arith.constant 0 : i32
    return %c0_i32, %arg0 : i32, i32
  }
  func.func @transform_1(%arg0: i32) -> (i32, i32) {
    %c0_i32 = arith.constant 0 : i32
    %c0_i32_0 = arith.constant 0 : i32
    return %c0_i32, %arg0 : i32, i32
  }
  func.func @transform_2(%arg0: i32) -> i32 {
    %c0_i32 = arith.constant 0 : i32
    %c0_i32_0 = arith.constant 0 : i32
    return %c0_i32 : i32
  }
  func.func @transform_3(%arg0: i32) -> (i32, i32) {
    %c0_i32 = arith.constant 0 : i32
    %c0_i32_0 = arith.constant 0 : i32
    %c0_i32_1 = arith.constant 0 : i32
    return %c0_i32, %c0_i32_0 : i32, i32
  }
  func.func @transform_4(%arg0: i32) -> (i32, i32) {
    %c0_i32 = arith.constant 0 : i32
    %c0_i32_0 = arith.constant 0 : i32
    return %c0_i32, %arg0 : i32, i32
  }
}

</mosaic_0001>

<llo_original>
// kernel: tpu_custom_call.1
$region0: #{tpu_custom_call.1}
  #allocation0 [shape = 'u32[]', space=smem, size = 0x4, offset = 0x4, fixed_abs, tag = 'smem constant byte address 0x4 - core index']
  #allocation1 [shape = 'u32[144,128]{1,0:T(1,128)}', space=vmem, size = 0x12000, scoped, tag = 'internal scratch']
  %s0 = inlined_call_operand.hbm [shape: f32[24,2048], index: 0, kind: input, shape index: {}]
  %s1 = inlined_call_operand.hbm [shape: f32[128,2048], index: 1, kind: input, shape index: {}]
  %s2 = inlined_call_operand.vmem [shape: f32[24], index: 2, kind: input, shape index: {}]
  %s3 = inlined_call_operand.hbm [shape: f32[32,128], index: 3, kind: input, shape index: {}]
  %s4 = inlined_call_operand.hbm [shape: f32[32,2048], index: 4, kind: output, shape index: {}]
  %s5 = sld [smem:[#allocation0]]
  $region65: #{tpu_custom_call.1} parent=0
    _
  %s7 = ssub.s32 1, %s5
  %s8 = scalar_select 0, %s7, %s5
  $region1: #{tpu_custom_call.1} parent=0
    #allocation2 [shape = 'u8[49152]{0}', space=vmem, size = 0xc000, scoped, tag = 'input window, operand 0']
    #allocation3 [shape = 's32[2]{0}', space=sflag, size = 0x8, scoped, tag = 'scoped memory for tpu_custom_call.1']
    #allocation4 [shape = 's32[2]{0}', space=sflag, size = 0x8, scoped, tag = 'scoped memory for tpu_custom_call.1']
    #allocation5 [shape = 's32[2]{0}', space=sflag, size = 0x8, scoped, tag = 'scoped memory for tpu_custom_call.1']
    #allocation6 [shape = 'u8[262144]{0}', space=vmem, size = 0x40000, scoped, tag = 'input window, operand 1']
    #allocation7 [shape = 's32[2]{0}', space=sflag, size = 0x8, scoped, tag = 'scoped memory for tpu_custom_call.1']
    #allocation8 [shape = 'u8[512]{0}', space=smem, size = 0x200, scoped, tag = 'input window, operand 2, single buffered']
    #allocation9 [shape = 'u8[16384]{0}', space=vmem, size = 0x4000, scoped, tag = 'input window, operand 3, single buffered']
    #allocation10 [shape = 'u8[65536]{0}', space=vmem, size = 0x10000, scoped, tag = 'output window, operand 0']
    %9 = vsyncpa [#allocation3], 0
    %s10 = scalar_lea.sflag [#allocation3], 1
    %11 = vsyncpa %s10, 0
    %12 = vsyncpa [#allocation7], 0
    %s13 = scalar_lea.sflag [#allocation7], 1
    %14 = vsyncpa %s13, 0
    %15 = vsyncpa [#allocation5], 0
    %16 = vsyncpa [#allocation4], 0
    %s17 = scalar_lea.sflag [#allocation4], 1
    %18 = vsyncpa %s17, 0
    loop: start=0, step=1, limit=10
    $region2: #{tpu_custom_call.1} parent=1 // loop_pre_header
      _
    $region3: #{tpu_custom_call.1} parent=1 // loop_header
      %s20 = sphi 0, %s24
      %p21 = scmp.ge.s32.totalorder %s20, 10
      %s30 = sphi 0, %s32
      %s33 = sphi 0, %s30
      %s34 = sphi 0, %s33
      %s50 = sphi 0, %s34
      %s56 = sphi 0, %s58
      %s59 = sphi 0, %s56
      %s60 = sphi 0, %s59
      %s76 = sphi 0, %s60
      %s80 = sphi 0, %s80
      %s82 = sphi 0, %s80
      %s83 = sphi 0, %s82
      %s97 = sphi 0, %s83
      %s101 = sphi 0, %s101
      %s103 = sphi 0, %s101
      %s104 = sphi 0, %s103
      %s118 = sphi 0, %s104
      %s124 = sphi 0, %s126
      %s127 = sphi 0, %s124
      %s128 = sphi 0, %s127
      %s144 = sphi 0, %s128
    $region4: #{tpu_custom_call.1} parent=1 // loop_header_branch
      %23 = sbr.rel (%p21) target = $region8
    $region5: #{tpu_custom_call.1} parent=1 // loop_body
      %s25 = ssub.s32 %s20, 1
      %s26 = ssub.s32 %s20, 2
      %s27 = sadd.s32 %s20, 1
      %s28 = ssub.s32 %s20, %s27
      %p29 = scmp.eq.s32.totalorder %s28, 0
      %s31 = sadd.s32 %s30, 1
      %s32 = scalar_select %p29, %s30, %s31
      %p35 = pneg %p29
      %p36 = scmp.eq.s32.totalorder %s20, 7
      %p37 = por %p35, %p36
      %p38 = scmp.ne.s32.totalorder %s30, %s33
      %p39 = scmp.eq.s32.totalorder %s20, 0
      %p40 = por %p38, %p39
      %p41 = scmp.ne.s32.totalorder %s30, %s33
      %p42 = scmp.eq.s32.totalorder %s25, 7
      %p43 = por %p41, %p42
      %p44 = scmp.ne.s32.totalorder %s33, %s34
      %p45 = scmp.eq.s32.totalorder %s25, 0
      %p46 = por %p44, %p45
      %p47 = scmp.ne.s32.totalorder %s33, %s34
      %p48 = scmp.eq.s32.totalorder %s26, 7
      %p49 = por %p47, %p48
      %p51 = scmp.ne.s32.totalorder %s34, %s50
      %p52 = scmp.eq.s32.totalorder %s26, 0
      %p53 = por %p51, %p52
      %s54 = ssub.s32 %s20, %s27
      %p55 = scmp.eq.s32.totalorder %s54, 0
      %s57 = sadd.s32 %s56, 1
      %s58 = scalar_select %p55, %s56, %s57
      %p61 = pneg %p55
      %p62 = scmp.eq.s32.totalorder %s20, 7
      %p63 = por %p61, %p62
      %p64 = scmp.ne.s32.totalorder %s56, %s59
      %p65 = scmp.eq.s32.totalorder %s20, 0
      %p66 = por %p64, %p65
      %p67 = scmp.ne.s32.totalorder %s56, %s59
      %p68 = scmp.eq.s32.totalorder %s25, 7
      %p69 = por %p67, %p68
      %p70 = scmp.ne.s32.totalorder %s59, %s60
      %p71 = scmp.eq.s32.totalorder %s25, 0
      %p72 = por %p70, %p71
      %p73 = scmp.ne.s32.totalorder %s59, %s60
      %p74 = scmp.eq.s32.totalorder %s26, 7
      %p75 = por %p73, %p74
      %p77 = scmp.ne.s32.totalorder %s60, %s76
      %p78 = scmp.eq.s32.totalorder %s26, 0
      %p79 = por %p77, %p78
      %s81 = sadd.s32 %s80, 1
      %p84 = scmp.eq.s32.totalorder %s20, 7
      %p85 = scmp.ne.s32.totalorder %s80, %s82
      %p86 = scmp.eq.s32.totalorder %s20, 0
      %p87 = por %p85, %p86
      %p88 = scmp.ne.s32.totalorder %s80, %s82
      %p89 = scmp.eq.s32.totalorder %s25, 7
      %p90 = por %p88, %p89
      %p91 = scmp.ne.s32.totalorder %s82, %s83
      %p92 = scmp.eq.s32.totalorder %s25, 0
      %p93 = por %p91, %p92
      %p94 = scmp.ne.s32.totalorder %s82, %s83
      %p95 = scmp.eq.s32.totalorder %s26, 7
      %p96 = por %p94, %p95
      %p98 = scmp.ne.s32.totalorder %s83, %s97
      %p99 = scmp.eq.s32.totalorder %s26, 0
      %p100 = por %p98, %p99
      %s102 = sadd.s32 %s101, 1
      %p105 = scmp.eq.s32.totalorder %s20, 7
      %p106 = scmp.ne.s32.totalorder %s101, %s103
      %p107 = scmp.eq.s32.totalorder %s20, 0
      %p108 = por %p106, %p107
      %p109 = scmp.ne.s32.totalorder %s101, %s103
      %p110 = scmp.eq.s32.totalorder %s25, 7
      %p111 = por %p109, %p110
      %p112 = scmp.ne.s32.totalorder %s103, %s104
      %p113 = scmp.eq.s32.totalorder %s25, 0
      %p114 = por %p112, %p113
      %p115 = scmp.ne.s32.totalorder %s103, %s104
      %p116 = scmp.eq.s32.totalorder %s26, 7
      %p117 = por %p115, %p116
      %p119 = scmp.ne.s32.totalorder %s104, %s118
      %p120 = scmp.eq.s32.totalorder %s26, 0
      %p121 = por %p119, %p120
      %s122 = ssub.s32 %s20, %s27
      %p123 = scmp.eq.s32.totalorder %s122, 0
      %s125 = sadd.s32 %s124, 1
      %s126 = scalar_select %p123, %s124, %s125
      %p129 = pneg %p123
      %p130 = scmp.eq.s32.totalorder %s20, 7
      %p131 = por %p129, %p130
      %p132 = scmp.ne.s32.totalorder %s124, %s127
      %p133 = scmp.eq.s32.totalorder %s20, 0
      %p134 = por %p132, %p133
      %p135 = scmp.ne.s32.totalorder %s124, %s127
      %p136 = scmp.eq.s32.totalorder %s25, 7
      %p137 = por %p135, %p136
      %p138 = scmp.ne.s32.totalorder %s127, %s128
      %p139 = scmp.eq.s32.totalorder %s25, 0
      %p140 = por %p138, %p139
      %p141 = scmp.ne.s32.totalorder %s127, %s128
      %p142 = scmp.eq.s32.totalorder %s26, 7
      %p143 = por %p141, %p142
      %p145 = scmp.ne.s32.totalorder %s128, %s144
      %p146 = scmp.eq.s32.totalorder %s26, 0
      %p147 = por %p145, %p146
      %p148 = scmp.le.s32.totalorder 1, %s20
      %p149 = scmp.lt.s32.totalorder %s20, 9
      %p150 = pnand %p148, %p149
      %p151 = pneg %p150
      // Predicated region
      $region9: #{tpu_custom_call.1} parent=5 // pred_check
        _
      $region10: #{tpu_custom_call.1} parent=5 // pred_check_branch
        %153 = sbr.rel (%p150) target = $region12
      $region11: #{tpu_custom_call.1} parent=5 // pred_region
        %s154 = ssub.s32 %s20, 1
        // Predicated region
        $region13: #{tpu_custom_call.1} parent=11 // pred_check
          %p155 = pneg %p93
        $region14: #{tpu_custom_call.1} parent=11 // pred_check_branch
          %157 = sbr.rel (%p155) target = $region16
        $region15: #{tpu_custom_call.1} parent=11 // pred_region
          %s159 = ssub.s32 16, 16
          %160 = vsyncadd [#allocation5], %s159
          %s162 = sshll.u32 %s2, 4
          %s163 = int_to_ptr.vmem [resolvable:$true] %s162
          %165 = dma.vmem_to_smem %s163, 16, [#allocation8], [#allocation5]
        $region16: #{tpu_custom_call.1} parent=11 // pred_fallthru
          _
        // Predicated region
        $region17: #{tpu_custom_call.1} parent=11 // pred_check
          %p166 = pneg %p114
        $region18: #{tpu_custom_call.1} parent=11 // pred_check_branch
          %168 = sbr.rel (%p166) target = $region20
        $region19: #{tpu_custom_call.1} parent=11 // pred_region
          %s170 = ssub.s32 512, 512
          %171 = vsyncadd [#allocation7], %s170
          %s172 = sshll.u32 [#allocation9], 4
          %s173 = int_to_ptr.vmem [resolvable:$true] %s172
          %178 = dma.hbm_to_vmem [thread:$0]  %s3, 512, %s173, [#allocation7], 128, 128, 8
        $region20: #{tpu_custom_call.1} parent=11 // pred_fallthru
          _
      $region12: #{tpu_custom_call.1} parent=5 // pred_fallthru
        _
      %p179 = scmp.lt.s32.totalorder %s20, 8
      // Predicated region
      $region21: #{tpu_custom_call.1} parent=5 // pred_check
        %p180 = pneg %p179
      $region22: #{tpu_custom_call.1} parent=5 // pred_check_branch
        %182 = sbr.rel (%p180) target = $region24
      $region23: #{tpu_custom_call.1} parent=5 // pred_region
        // Predicated region
        $region25: #{tpu_custom_call.1} parent=23 // pred_check
          %p183 = pneg %p40
        $region26: #{tpu_custom_call.1} parent=23 // pred_check_branch
          %185 = sbr.rel (%p183) target = $region28
        $region27: #{tpu_custom_call.1} parent=23 // pred_region
          %s186 = sand.u32 %s30, 1
          %s187 = scalar_lea.sflag [#allocation3], %s186
          %s188 = sand.u32 %s30, 1
          %s189 = smul.addr %s188, 48
          %s190 = scalar_lea.vmem [#allocation2], %s189
          %s191 = smul.u32 2, %s20
          %s193 = ssub.s32 768, 768
          %194 = vsyncadd %s187, %s193
          %s195 = smul.addr %s191, 128
          %s196 = scalar_lea.hbm %s0, %s195
          %s197 = sshll.u32 %s190, 4
          %s198 = int_to_ptr.vmem [resolvable:$true] %s197
          %203 = dma.hbm_to_vmem [thread:$0]  %s196, 768, %s198, %s187, 2048, 256, 16
        $region28: #{tpu_custom_call.1} parent=23 // pred_fallthru
          _
        // Predicated region
        $region29: #{tpu_custom_call.1} parent=23 // pred_check
          %p204 = pneg %p66
        $region30: #{tpu_custom_call.1} parent=23 // pred_check_branch
          %206 = sbr.rel (%p204) target = $region32
        $region31: #{tpu_custom_call.1} parent=23 // pred_region
          %s207 = sand.u32 %s20, 1
          %s208 = scalar_lea.sflag [#allocation7], %s207
          %s209 = sand.u32 %s56, 1
          %s210 = smul.addr %s209, 256
          %s211 = scalar_lea.vmem [#allocation6], %s210
          %s212 = smul.u32 2, %s20
          %s214 = ssub.s32 4096, 4096
          %215 = vsyncadd %s208, %s214
          %s216 = smul.addr %s212, 128
          %s217 = scalar_lea.hbm %s1, %s216
          %s218 = sshll.u32 %s211, 4
          %s219 = int_to_ptr.vmem [resolvable:$true] %s218
          %224 = dma.hbm_to_vmem [thread:$0]  %s217, 4096, %s219, %s208, 2048, 256, 16
        $region32: #{tpu_custom_call.1} parent=23 // pred_fallthru
          _
      $region24: #{tpu_custom_call.1} parent=5 // pred_fallthru
        _
      %p225 = scmp.le.s32.totalorder 1, %s20
      %p226 = scmp.lt.s32.totalorder %s20, 9
      %p227 = pnand %p225, %p226
      %p228 = pneg %p227
      // Predicated region
      $region33: #{tpu_custom_call.1} parent=5 // pred_check
        _
      $region34: #{tpu_custom_call.1} parent=5 // pred_check_branch
        %230 = sbr.rel (%p227) target = $region36
      $region35: #{tpu_custom_call.1} parent=5 // pred_region
        %s231 = ssub.s32 %s20, 1
        %s232 = sand.u32 %s33, 1
        %s233 = scalar_lea.sflag [#allocation3], %s232
        %s234 = sand.u32 %s33, 1
        %s235 = smul.addr %s234, 48
        %s236 = scalar_lea.vmem [#allocation2], %s235
        // Predicated region
        $region37: #{tpu_custom_call.1} parent=35 // pred_check
          %p237 = pneg %p46
        $region38: #{tpu_custom_call.1} parent=35 // pred_check_branch
          %239 = sbr.rel (%p237) target = $region40
        $region39: #{tpu_custom_call.1} parent=35 // pred_region
          %240 = dma.done %s233, 768
        $region40: #{tpu_custom_call.1} parent=35 // pred_fallthru
          _
        %s241 = sand.u32 %s25, 1
        %s242 = scalar_lea.sflag [#allocation7], %s241
        %s243 = sand.u32 %s59, 1
        %s244 = smul.addr %s243, 256
        %s245 = scalar_lea.vmem [#allocation6], %s244
        // Predicated region
        $region41: #{tpu_custom_call.1} parent=35 // pred_check
          %p246 = pneg %p72
        $region42: #{tpu_custom_call.1} parent=35 // pred_check_branch
          %248 = sbr.rel (%p246) target = $region44
        $region43: #{tpu_custom_call.1} parent=35 // pred_region
          %249 = dma.done %s242, 4096
        $region44: #{tpu_custom_call.1} parent=35 // pred_fallthru
          _
        // Predicated region
        $region45: #{tpu_custom_call.1} parent=35 // pred_check
          %p250 = pneg %p93
        $region46: #{tpu_custom_call.1} parent=35 // pred_check_branch
          %252 = sbr.rel (%p250) target = $region48
        $region47: #{tpu_custom_call.1} parent=35 // pred_region
          %253 = dma.done [#allocation5], 16
        $region48: #{tpu_custom_call.1} parent=35 // pred_fallthru
          _
        // Predicated region
        $region49: #{tpu_custom_call.1} parent=35 // pred_check
          %p254 = pneg %p114
        $region50: #{tpu_custom_call.1} parent=35 // pred_check_branch
          %256 = sbr.rel (%p254) target = $region52
        $region51: #{tpu_custom_call.1} parent=35 // pred_region
          %257 = dma.done [#allocation7], 512
        $region52: #{tpu_custom_call.1} parent=35 // pred_fallthru
          _
        %258 = sfence
        %s259 = sand.u32 %s33, 1
        %s260 = scalar_lea.sflag [#allocation3], %s259
        %s261 = sand.u32 %s33, 1
        %s262 = smul.addr %s261, 48
        %s263 = scalar_lea.vmem [#allocation2], %s262
        %p264 = pneg %p46
        %p265 = pneg %p43
        %s266 = sand.u32 %s25, 1
        %s267 = scalar_lea.sflag [#allocation7], %s266
        %s268 = sand.u32 %s59, 1
        %s269 = smul.addr %s268, 256
        %s270 = scalar_lea.vmem [#allocation6], %s269
        %p271 = pneg %p72
        %p272 = pneg %p69
        %p273 = pneg %p93
        %p274 = pneg %p90
        %p275 = pneg %p114
        %p276 = pneg %p111
        %p277 = pneg %p140
        %p278 = pneg %p137
        %s279 = sand.u32 %s127, 1
        %s280 = scalar_lea.sflag [#allocation4], %s279
        %s281 = sand.u32 %s127, 1
        %s282 = smul.addr %s281, 64
        %s283 = scalar_lea.vmem [#allocation10], %s282
        %s284 = smul.u32 2, %s25
        %s285 = smul.u32 2, %s25
        %s286 = smul.u32 2, %s25
        %v287 = vld [vmem:[%s236] sm:$0xff]
        %v288 = vld [vmem:[%s236 + $0x8] sm:$0xff]
        %v289 = vld [vmem:[%s236 + $0x10] sm:$0xff]
        %v290 = vld [vmem:[%s236 + $0x18] sm:$0xff]
        %v291 = vld [vmem:[%s236 + $0x20] sm:$0xff]
        %v292 = vld [vmem:[%s236 + $0x28] sm:$0xff]
        %s293 = sld [smem:[#allocation8]]
        %v294 = vstv %s293
        %v295 = vsub.f32 %v287, %v294
        %v296 = vsub.f32 %v288, %v294
        %v297 = vmul.f32 %v295, %v295
        %v298 = vmul.f32 %v296, %v296
        %s299 = sld [smem:[#allocation8 + $0x1]]
        %v300 = vstv %s299
        %v301 = vsub.f32 %v289, %v300
        %v302 = vsub.f32 %v290, %v300
        %v303 = vmul.f32 %v301, %v301
        %v304 = vmul.f32 %v302, %v302
        %v305 = vadd.f32 %v297, %v303
        %v306 = vadd.f32 %v298, %v304
        %s307 = sld [smem:[#allocation8 + $0x2]]
        %v308 = vstv %s307
        %v309 = vsub.f32 %v291, %v308
        %v310 = vsub.f32 %v292, %v308
        %v311 = vmul.f32 %v309, %v309
        %v312 = vmul.f32 %v310, %v310
        %v313 = vadd.f32 %v305, %v311
        %v314 = vadd.f32 %v306, %v312
        %s315 = sld [smem:[#allocation8 + $0x3]]
        %v316 = vstv %s315
        %v317 = vsub.f32 %v287, %v316
        %v318 = vsub.f32 %v288, %v316
        %v319 = vmul.f32 %v317, %v317
        %v320 = vmul.f32 %v318, %v318
        %s321 = sld [smem:[#allocation8 + $0x4]]
        %v322 = vstv %s321
        %v323 = vsub.f32 %v289, %v322
        %v324 = vsub.f32 %v290, %v322
        %v325 = vmul.f32 %v323, %v323
        %v326 = vmul.f32 %v324, %v324
        %v327 = vadd.f32 %v319, %v325
        %v328 = vadd.f32 %v320, %v326
        %s329 = sld [smem:[#allocation8 + $0x5]]
        %v330 = vstv %s329
        %v331 = vsub.f32 %v291, %v330
        %v332 = vsub.f32 %v292, %v330
        %v333 = vmul.f32 %v331, %v331
        %v334 = vmul.f32 %v332, %v332
        %v335 = vadd.f32 %v327, %v333
        %v336 = vadd.f32 %v328, %v334
        %vm337 = vcmp.lt.f32.partialorder %v335, %v313
        %vm338 = vcmp.lt.f32.partialorder %v336, %v314
        %v339 = vsel %vm337, 1, 0
        %v340 = vsel %vm338, 1, 0
        %v341 = vsel %vm337, %v335, %v313
        %v342 = vsel %vm338, %v336, %v314
        %s343 = sld [smem:[#allocation8 + $0x6]]
        %v344 = vstv %s343
        %v345 = vsub.f32 %v287, %v344
        %v346 = vsub.f32 %v288, %v344
        %v347 = vmul.f32 %v345, %v345
        %v348 = vmul.f32 %v346, %v346
        %s349 = sld [smem:[#allocation8 + $0x7]]
        %v350 = vstv %s349
        %v351 = vsub.f32 %v289, %v350
        %v352 = vsub.f32 %v290, %v350
        %v353 = vmul.f32 %v351, %v351
        %v354 = vmul.f32 %v352, %v352
        %v355 = vadd.f32 %v347, %v353
        %v356 = vadd.f32 %v348, %v354
        %s357 = sld [smem:[#allocation8 + $0x8]]
        %v358 = vstv %s357
        %v359 = vsub.f32 %v291, %v358
        %v360 = vsub.f32 %v292, %v358
        %v361 = vmul.f32 %v359, %v359
        %v362 = vmul.f32 %v360, %v360
        %v363 = vadd.f32 %v355, %v361
        %v364 = vadd.f32 %v356, %v362
        %vm365 = vcmp.lt.f32.partialorder %v363, %v341
        %vm366 = vcmp.lt.f32.partialorder %v364, %v342
        %v367 = vsel %vm365, 2, %v339
        %v368 = vsel %vm366, 2, %v340
        %v369 = vsel %vm365, %v363, %v341
        %v370 = vsel %vm366, %v364, %v342
        %s371 = sld [smem:[#allocation8 + $0x9]]
        %v372 = vstv %s371
        %v373 = vsub.f32 %v287, %v372
        %v374 = vsub.f32 %v288, %v372
        %v375 = vmul.f32 %v373, %v373
        %v376 = vmul.f32 %v374, %v374
        %s377 = sld [smem:[#allocation8 + $0xa]]
        %v378 = vstv %s377
        %v379 = vsub.f32 %v289, %v378
        %v380 = vsub.f32 %v290, %v378
        %v381 = vmul.f32 %v379, %v379
        %v382 = vmul.f32 %v380, %v380
        %v383 = vadd.f32 %v375, %v381
        %v384 = vadd.f32 %v376, %v382
        %s385 = sld [smem:[#allocation8 + $0xb]]
        %v386 = vstv %s385
        %v387 = vsub.f32 %v291, %v386
        %v388 = vsub.f32 %v292, %v386
        %v389 = vmul.f32 %v387, %v387
        %v390 = vmul.f32 %v388, %v388
        %v391 = vadd.f32 %v383, %v389
        %v392 = vadd.f32 %v384, %v390
        %vm393 = vcmp.lt.f32.partialorder %v391, %v369
        %vm394 = vcmp.lt.f32.partialorder %v392, %v370
        %v395 = vsel %vm393, 3, %v367
        %v396 = vsel %vm394, 3, %v368
        %v397 = vsel %vm393, %v391, %v369
        %v398 = vsel %vm394, %v392, %v370
        %s399 = sld [smem:[#allocation8 + $0xc]]
        %v400 = vstv %s399
        %v401 = vsub.f32 %v287, %v400
        %v402 = vsub.f32 %v288, %v400
        %v403 = vmul.f32 %v401, %v401
        %v404 = vmul.f32 %v402, %v402
        %s405 = sld [smem:[#allocation8 + $0xd]]
        %v406 = vstv %s405
        %v407 = vsub.f32 %v289, %v406
        %v408 = vsub.f32 %v290, %v406
        %v409 = vmul.f32 %v407, %v407
        %v410 = vmul.f32 %v408, %v408
        %v411 = vadd.f32 %v403, %v409
        %v412 = vadd.f32 %v404, %v410
        %s413 = sld [smem:[#allocation8 + $0xe]]
        %v414 = vstv %s413
        %v415 = vsub.f32 %v291, %v414
        %v416 = vsub.f32 %v292, %v414
        %v417 = vmul.f32 %v415, %v415
        %v418 = vmul.f32 %v416, %v416
        %v419 = vadd.f32 %v411, %v417
        %v420 = vadd.f32 %v412, %v418
        %vm421 = vcmp.lt.f32.partialorder %v419, %v397
        %vm422 = vcmp.lt.f32.partialorder %v420, %v398
        %v423 = vsel %vm421, 4, %v395
        %v424 = vsel %vm422, 4, %v396
        %v425 = vsel %vm421, %v419, %v397
        %v426 = vsel %vm422, %v420, %v398
        %s427 = sld [smem:[#allocation8 + $0xf]]
        %v428 = vstv %s427
        %v429 = vsub.f32 %v287, %v428
        %v430 = vsub.f32 %v288, %v428
        %v431 = vmul.f32 %v429, %v429
        %v432 = vmul.f32 %v430, %v430
        %s433 = sld [smem:[#allocation8 + $0x10]]
        %v434 = vstv %s433
        %v435 = vsub.f32 %v289, %v434
        %v436 = vsub.f32 %v290, %v434
        %v437 = vmul.f32 %v435, %v435
        %v438 = vmul.f32 %v436, %v436
        %v439 = vadd.f32 %v431, %v437
        %v440 = vadd.f32 %v432, %v438
        %s441 = sld [smem:[#allocation8 + $0x11]]
        %v442 = vstv %s441
        %v443 = vsub.f32 %v291, %v442
        %v444 = vsub.f32 %v292, %v442
        %v445 = vmul.f32 %v443, %v443
        %v446 = vmul.f32 %v444, %v444
        %v447 = vadd.f32 %v439, %v445
        %v448 = vadd.f32 %v440, %v446
        %vm449 = vcmp.lt.f32.partialorder %v447, %v425
        %vm450 = vcmp.lt.f32.partialorder %v448, %v426
        %v451 = vsel %vm449, 5, %v423
        %v452 = vsel %vm450, 5, %v424
        %v453 = vsel %vm449, %v447, %v425
        %v454 = vsel %vm450, %v448, %v426
        %s455 = sld [smem:[#allocation8 + $0x12]]
        %v456 = vstv %s455
        %v457 = vsub.f32 %v287, %v456
        %v458 = vsub.f32 %v288, %v456
        %v459 = vmul.f32 %v457, %v457
        %v460 = vmul.f32 %v458, %v458
        %s461 = sld [smem:[#allocation8 + $0x13]]
        %v462 = vstv %s461
        %v463 = vsub.f32 %v289, %v462
        %v464 = vsub.f32 %v290, %v462
        %v465 = vmul.f32 %v463, %v463
        %v466 = vmul.f32 %v464, %v464
        %v467 = vadd.f32 %v459, %v465
        %v468 = vadd.f32 %v460, %v466
        %s469 = sld [smem:[#allocation8 + $0x14]]
        %v470 = vstv %s469
        %v471 = vsub.f32 %v291, %v470
        %v472 = vsub.f32 %v292, %v470
        %v473 = vmul.f32 %v471, %v471
        %v474 = vmul.f32 %v472, %v472
        %v475 = vadd.f32 %v467, %v473
        %v476 = vadd.f32 %v468, %v474
        %vm477 = vcmp.lt.f32.partialorder %v475, %v453
        %vm478 = vcmp.lt.f32.partialorder %v476, %v454
        %v479 = vsel %vm477, 6, %v451
        %v480 = vsel %vm478, 6, %v452
        %v481 = vsel %vm477, %v475, %v453
        %v482 = vsel %vm478, %v476, %v454
        %s483 = sld [smem:[#allocation8 + $0x15]]
        %v484 = vstv %s483
        %v485 = vsub.f32 %v287, %v484
        %v486 = vsub.f32 %v288, %v484
        %v487 = vmul.f32 %v485, %v485
        %v488 = vmul.f32 %v486, %v486
        %s489 = sld [smem:[#allocation8 + $0x16]]
        %v490 = vstv %s489
        %v491 = vsub.f32 %v289, %v490
        %v492 = vsub.f32 %v290, %v490
        %v493 = vmul.f32 %v491, %v491
        %v494 = vmul.f32 %v492, %v492
        %v495 = vadd.f32 %v487, %v493
        %v496 = vadd.f32 %v488, %v494
        %s497 = sld [smem:[#allocation8 + $0x17]]
        %v498 = vstv %s497
        %v499 = vsub.f32 %v291, %v498
        %v500 = vsub.f32 %v292, %v498
        %v501 = vmul.f32 %v499, %v499
        %v502 = vmul.f32 %v500, %v500
        %v503 = vadd.f32 %v495, %v501
        %v504 = vadd.f32 %v496, %v502
        %vm505 = vcmp.lt.f32.partialorder %v503, %v481
        %vm506 = vcmp.lt.f32.partialorder %v504, %v482
        %v507 = vsel %vm505, 7, %v479
        %v508 = vsel %vm506, 7, %v480
        %v509 = vsel %vm505, %v503, %v481
        %v510 = vsel %vm506, %v504, %v482
        %v511 = vrsqrt.pop %v509
        %v512 = vmul.f32 %v509, %v511
        %vm513 = vcmp.eq.f32.partialorder %v509, inf
        %v514 = vsel %vm513, %v509, %v512
        %vm515 = vcmp.eq.f32.partialorder %v509, 0.0
        %v516 = vand.u32 %v509, 2147483648
        %v517 = vsel %vm515, %v516, %v514
        %v518 = vrsqrt.pop %v510
        %v519 = vmul.f32 %v510, %v518
        %vm520 = vcmp.eq.f32.partialorder %v510, inf
        %v521 = vsel %vm520, %v510, %v519
        %vm522 = vcmp.eq.f32.partialorder %v510, 0.0
        %v523 = vand.u32 %v510, 2147483648
        %v524 = vsel %vm522, %v523, %v521
        %v525 = vsub.f32 1.0, %v517
        %v526 = vsub.f32 1.0, %v524
        %v527 = vmax.f32 %v525, 0.0
        %v528 = vmax.f32 %v526, 0.0
        %v529 = vld [vmem:[%s245] sm:$0xff]
        %v530 = vld [vmem:[%s245 + $0x8] sm:$0xff]
        %v531 = vld [vmem:[%s245 + $0x10] sm:$0xff]
        %v532 = vld [vmem:[%s245 + $0x18] sm:$0xff]
        %vm533 = vcmp.eq.s32.totalorder %v507, 0
        %vm534 = vcmp.eq.s32.totalorder %v508, 0
        %v535 = vsel %vm533, %v527, 0.0
        %v536 = vsel %vm534, %v528, 0.0
        %v537 = vlaneseq
        %v538 = vshrl.u32 %v537, 7
        %v539 = vsub.s32 0, %v538
        %v540 = vrot.slane %v535, %v539
        %v541 = vlaneseq
        %v542 = vshrl.u32 %v541, 7
        %v543 = vsub.s32 0, %v542
        %v544 = vrot.slane %v536, %v543
        %v545 = vmul.f32 %v540, %v529
        %v546 = vmul.f32 %v544, %v530
        %v547 = vmul.f32 %v540, %v531
        %v548 = vmul.f32 %v544, %v532
        %vm549 = vcmp.eq.s32.totalorder %v507, 1
        %vm550 = vcmp.eq.s32.totalorder %v508, 1
        %v551 = vsel %vm549, %v527, 0.0
        %v552 = vsel %vm550, %v528, 0.0
        %v553 = vlaneseq
        %v554 = vshrl.u32 %v553, 7
        %v555 = vsub.s32 0, %v554
        %v556 = vrot.slane %v551, %v555
        %v557 = vlaneseq
        %v558 = vshrl.u32 %v557, 7
        %v559 = vsub.s32 0, %v558
        %v560 = vrot.slane %v552, %v559
        %v561 = vmul.f32 %v556, %v529
        %v562 = vmul.f32 %v560, %v530
        %v563 = vmul.f32 %v556, %v531
        %v564 = vmul.f32 %v560, %v532
        %vm565 = vcmp.eq.s32.totalorder %v507, 2
        %vm566 = vcmp.eq.s32.totalorder %v508, 2
        %v567 = vsel %vm565, %v527, 0.0
        %v568 = vsel %vm566, %v528, 0.0
        %v569 = vlaneseq
        %v570 = vshrl.u32 %v569, 7
        %v571 = vsub.s32 0, %v570
        %v572 = vrot.slane %v567, %v571
        %v573 = vlaneseq
        %v574 = vshrl.u32 %v573, 7
        %v575 = vsub.s32 0, %v574
        %v576 = vrot.slane %v568, %v575
        %v577 = vmul.f32 %v572, %v529
        %v578 = vmul.f32 %v576, %v530
        %v579 = vmul.f32 %v572, %v531
        %v580 = vmul.f32 %v576, %v532
        %vm581 = vcmp.eq.s32.totalorder %v507, 3
        %vm582 = vcmp.eq.s32.totalorder %v508, 3
        %v583 = vsel %vm581, %v527, 0.0
        %v584 = vsel %vm582, %v528, 0.0
        %v585 = vlaneseq
        %v586 = vshrl.u32 %v585, 7
        %v587 = vsub.s32 0, %v586
        %v588 = vrot.slane %v583, %v587
        %v589 = vlaneseq
        %v590 = vshrl.u32 %v589, 7
        %v591 = vsub.s32 0, %v590
        %v592 = vrot.slane %v584, %v591
        %v593 = vmul.f32 %v588, %v529
        %v594 = vmul.f32 %v592, %v530
        %v595 = vmul.f32 %v588, %v531
        %v596 = vmul.f32 %v592, %v532
        %vm597 = vcmp.eq.s32.totalorder %v507, 4
        %vm598 = vcmp.eq.s32.totalorder %v508, 4
        %v599 = vsel %vm597, %v527, 0.0
        %v600 = vsel %vm598, %v528, 0.0
        %v601 = vlaneseq
        %v602 = vshrl.u32 %v601, 7
        %v603 = vsub.s32 0, %v602
        %v604 = vrot.slane %v599, %v603
        %v605 = vlaneseq
        %v606 = vshrl.u32 %v605, 7
        %v607 = vsub.s32 0, %v606
        %v608 = vrot.slane %v600, %v607
        %v609 = vmul.f32 %v604, %v529
        %v610 = vmul.f32 %v608, %v530
        %v611 = vmul.f32 %v604, %v531
        %v612 = vmul.f32 %v608, %v532
        %vm613 = vcmp.eq.s32.totalorder %v507, 5
        %vm614 = vcmp.eq.s32.totalorder %v508, 5
        %v615 = vsel %vm613, %v527, 0.0
        %v616 = vsel %vm614, %v528, 0.0
        %v617 = vlaneseq
        %v618 = vshrl.u32 %v617, 7
        %v619 = vsub.s32 0, %v618
        %v620 = vrot.slane %v615, %v619
        %v621 = vlaneseq
        %v622 = vshrl.u32 %v621, 7
        %v623 = vsub.s32 0, %v622
        %v624 = vrot.slane %v616, %v623
        %v625 = vmul.f32 %v620, %v529
        %v626 = vmul.f32 %v624, %v530
        %v627 = vmul.f32 %v620, %v531
        %v628 = vmul.f32 %v624, %v532
        %vm629 = vcmp.eq.s32.totalorder %v507, 6
        %vm630 = vcmp.eq.s32.totalorder %v508, 6
        %v631 = vsel %vm629, %v527, 0.0
        %v632 = vsel %vm630, %v528, 0.0
        %v633 = vlaneseq
        %v634 = vshrl.u32 %v633, 7
        %v635 = vsub.s32 0, %v634
        %v636 = vrot.slane %v631, %v635
        %v637 = vlaneseq
        %v638 = vshrl.u32 %v637, 7
        %v639 = vsub.s32 0, %v638
        %v640 = vrot.slane %v632, %v639
        %v641 = vmul.f32 %v636, %v529
        %v642 = vmul.f32 %v640, %v530
        %v643 = vmul.f32 %v636, %v531
        %v644 = vmul.f32 %v640, %v532
        %vm645 = vcmp.eq.s32.totalorder %v507, 7
        %vm646 = vcmp.eq.s32.totalorder %v508, 7
        %v647 = vsel %vm645, %v527, 0.0
        %v648 = vsel %vm646, %v528, 0.0
        %v649 = vlaneseq
        %v650 = vshrl.u32 %v649, 7
        %v651 = vsub.s32 0, %v650
        %v652 = vrot.slane %v647, %v651
        %v653 = vlaneseq
        %v654 = vshrl.u32 %v653, 7
        %v655 = vsub.s32 0, %v654
        %v656 = vrot.slane %v648, %v655
        %v657 = vmul.f32 %v652, %v529
        %v658 = vmul.f32 %v656, %v530
        %v659 = vmul.f32 %v652, %v531
        %v660 = vmul.f32 %v656, %v532
        %v661 = vld [vmem:[%s245 + $0x20] sm:$0xff]
        %v662 = vld [vmem:[%s245 + $0x28] sm:$0xff]
        %v663 = vld [vmem:[%s245 + $0x30] sm:$0xff]
        %v664 = vld [vmem:[%s245 + $0x38] sm:$0xff]
        %v665 = vlaneseq
        %v666 = vshrl.u32 %v665, 7
        %v667 = vsub.s32 1, %v666
        %v668 = vrot.slane %v535, %v667
        %v669 = vlaneseq
        %v670 = vshrl.u32 %v669, 7
        %v671 = vsub.s32 1, %v670
        %v672 = vrot.slane %v536, %v671
        %v673 = vmul.f32 %v668, %v661
        %v674 = vmul.f32 %v672, %v662
        %v675 = vmul.f32 %v668, %v663
        %v676 = vmul.f32 %v672, %v664
        %v677 = vadd.f32 %v545, %v673
        %v678 = vadd.f32 %v546, %v674
        %v679 = vadd.f32 %v547, %v675
        %v680 = vadd.f32 %v548, %v676
        %v681 = vlaneseq
        %v682 = vshrl.u32 %v681, 7
        %v683 = vsub.s32 1, %v682
        %v684 = vrot.slane %v551, %v683
        %v685 = vlaneseq
        %v686 = vshrl.u32 %v685, 7
        %v687 = vsub.s32 1, %v686
        %v688 = vrot.slane %v552, %v687
        %v689 = vmul.f32 %v684, %v661
        %v690 = vmul.f32 %v688, %v662
        %v691 = vmul.f32 %v684, %v663
        %v692 = vmul.f32 %v688, %v664
        %v693 = vadd.f32 %v561, %v689
        %v694 = vadd.f32 %v562, %v690
        %v695 = vadd.f32 %v563, %v691
        %v696 = vadd.f32 %v564, %v692
        %v697 = vlaneseq
        %v698 = vshrl.u32 %v697, 7
        %v699 = vsub.s32 1, %v698
        %v700 = vrot.slane %v567, %v699
        %v701 = vlaneseq
        %v702 = vshrl.u32 %v701, 7
        %v703 = vsub.s32 1, %v702
        %v704 = vrot.slane %v568, %v703
        %v705 = vmul.f32 %v700, %v661
        %v706 = vmul.f32 %v704, %v662
        %v707 = vmul.f32 %v700, %v663
        %v708 = vmul.f32 %v704, %v664
        %v709 = vadd.f32 %v577, %v705
        %v710 = vadd.f32 %v578, %v706
        %v711 = vadd.f32 %v579, %v707
        %v712 = vadd.f32 %v580, %v708
        %v713 = vlaneseq
        %v714 = vshrl.u32 %v713, 7
        %v715 = vsub.s32 1, %v714
        %v716 = vrot.slane %v583, %v715
        %v717 = vlaneseq
        %v718 = vshrl.u32 %v717, 7
        %v719 = vsub.s32 1, %v718
        %v720 = vrot.slane %v584, %v719
        %v721 = vmul.f32 %v716, %v661
        %v722 = vmul.f32 %v720, %v662
        %v723 = vmul.f32 %v716, %v663
        %v724 = vmul.f32 %v720, %v664
        %v725 = vadd.f32 %v593, %v721
        %v726 = vadd.f32 %v594, %v722
        %v727 = vadd.f32 %v595, %v723
        %v728 = vadd.f32 %v596, %v724
        %v729 = vlaneseq
        %v730 = vshrl.u32 %v729, 7
        %v731 = vsub.s32 1, %v730
        %v732 = vrot.slane %v599, %v731
        %v733 = vlaneseq
        %v734 = vshrl.u32 %v733, 7
        %v735 = vsub.s32 1, %v734
        %v736 = vrot.slane %v600, %v735
        %v737 = vmul.f32 %v732, %v661
        %v738 = vmul.f32 %v736, %v662
        %v739 = vmul.f32 %v732, %v663
        %v740 = vmul.f32 %v736, %v664
        %v741 = vadd.f32 %v609, %v737
        %v742 = vadd.f32 %v610, %v738
        %v743 = vadd.f32 %v611, %v739
        %v744 = vadd.f32 %v612, %v740
        %v745 = vlaneseq
        %v746 = vshrl.u32 %v745, 7
        %v747 = vsub.s32 1, %v746
        %v748 = vrot.slane %v615, %v747
        %v749 = vlaneseq
        %v750 = vshrl.u32 %v749, 7
        %v751 = vsub.s32 1, %v750
        %v752 = vrot.slane %v616, %v751
        %v753 = vmul.f32 %v748, %v661
        %v754 = vmul.f32 %v752, %v662
        %v755 = vmul.f32 %v748, %v663
        %v756 = vmul.f32 %v752, %v664
        %v757 = vadd.f32 %v625, %v753
        %v758 = vadd.f32 %v626, %v754
        %v759 = vadd.f32 %v627, %v755
        %v760 = vadd.f32 %v628, %v756
        %v761 = vlaneseq
        %v762 = vshrl.u32 %v761, 7
        %v763 = vsub.s32 1, %v762
        %v764 = vrot.slane %v631, %v763
        %v765 = vlaneseq
        %v766 = vshrl.u32 %v765, 7
        %v767 = vsub.s32 1, %v766
        %v768 = vrot.slane %v632, %v767
        %v769 = vmul.f32 %v764, %v661
        %v770 = vmul.f32 %v768, %v662
        %v771 = vmul.f32 %v764, %v663
        %v772 = vmul.f32 %v768, %v664
        %v773 = vadd.f32 %v641, %v769
        %v774 = vadd.f32 %v642, %v770
        %v775 = vadd.f32 %v643, %v771
        %v776 = vadd.f32 %v644, %v772
        %v777 = vlaneseq
        %v778 = vshrl.u32 %v777, 7
        %v779 = vsub.s32 1, %v778
        %v780 = vrot.slane %v647, %v779
        %v781 = vlaneseq
        %v782 = vshrl.u32 %v781, 7
        %v783 = vsub.s32 1, %v782
        %v784 = vrot.slane %v648, %v783
        %v785 = vmul.f32 %v780, %v661
        %v786 = vmul.f32 %v784, %v662
        %v787 = vmul.f32 %v780, %v663
        %v788 = vmul.f32 %v784, %v664
        %v789 = vadd.f32 %v657, %v785
        %v790 = vadd.f32 %v658, %v786
        %v791 = vadd.f32 %v659, %v787
        %v792 = vadd.f32 %v660, %v788
        %v793 = vld [vmem:[%s245 + $0x40] sm:$0xff]
        %v794 = vld [vmem:[%s245 + $0x48] sm:$0xff]
        %v795 = vld [vmem:[%s245 + $0x50] sm:$0xff]
        %v796 = vld [vmem:[%s245 + $0x58] sm:$0xff]
        %v797 = vlaneseq
        %v798 = vshrl.u32 %v797, 7
        %v799 = vsub.s32 2, %v798
        %v800 = vrot.slane %v535, %v799
        %v801 = vlaneseq
        %v802 = vshrl.u32 %v801, 7
        %v803 = vsub.s32 2, %v802
        %v804 = vrot.slane %v536, %v803
        %v805 = vmul.f32 %v800, %v793
        %v806 = vmul.f32 %v804, %v794
        %v807 = vmul.f32 %v800, %v795
        %v808 = vmul.f32 %v804, %v796
        %v809 = vadd.f32 %v677, %v805
        %v810 = vadd.f32 %v678, %v806
        %v811 = vadd.f32 %v679, %v807
        %v812 = vadd.f32 %v680, %v808
        %v813 = vlaneseq
        %v814 = vshrl.u32 %v813, 7
        %v815 = vsub.s32 2, %v814
        %v816 = vrot.slane %v551, %v815
        %v817 = vlaneseq
        %v818 = vshrl.u32 %v817, 7
        %v819 = vsub.s32 2, %v818
        %v820 = vrot.slane %v552, %v819
        %v821 = vmul.f32 %v816, %v793
        %v822 = vmul.f32 %v820, %v794
        %v823 = vmul.f32 %v816, %v795
        %v824 = vmul.f32 %v820, %v796
        %v825 = vadd.f32 %v693, %v821
        %v826 = vadd.f32 %v694, %v822
        %v827 = vadd.f32 %v695, %v823
        %v828 = vadd.f32 %v696, %v824
        %v829 = vlaneseq
        %v830 = vshrl.u32 %v829, 7
        %v831 = vsub.s32 2, %v830
        %v832 = vrot.slane %v567, %v831
        %v833 = vlaneseq
        %v834 = vshrl.u32 %v833, 7
        %v835 = vsub.s32 2, %v834
        %v836 = vrot.slane %v568, %v835
        %v837 = vmul.f32 %v832, %v793
        %v838 = vmul.f32 %v836, %v794
        %v839 = vmul.f32 %v832, %v795
        %v840 = vmul.f32 %v836, %v796
        %v841 = vadd.f32 %v709, %v837
        %v842 = vadd.f32 %v710, %v838
        %v843 = vadd.f32 %v711, %v839
        %v844 = vadd.f32 %v712, %v840
        %v845 = vlaneseq
        %v846 = vshrl.u32 %v845, 7
        %v847 = vsub.s32 2, %v846
        %v848 = vrot.slane %v583, %v847
        %v849 = vlaneseq
        %v850 = vshrl.u32 %v849, 7
        %v851 = vsub.s32 2, %v850
        %v852 = vrot.slane %v584, %v851
        %v853 = vmul.f32 %v848, %v793
        %v854 = vmul.f32 %v852, %v794
        %v855 = vmul.f32 %v848, %v795
        %v856 = vmul.f32 %v852, %v796
        %v857 = vadd.f32 %v725, %v853
        %v858 = vadd.f32 %v726, %v854
        %v859 = vadd.f32 %v727, %v855
        %v860 = vadd.f32 %v728, %v856
        %v861 = vlaneseq
        %v862 = vshrl.u32 %v861, 7
        %v863 = vsub.s32 2, %v862
        %v864 = vrot.slane %v599, %v863
        %v865 = vlaneseq
        %v866 = vshrl.u32 %v865, 7
        %v867 = vsub.s32 2, %v866
        %v868 = vrot.slane %v600, %v867
        %v869 = vmul.f32 %v864, %v793
        %v870 = vmul.f32 %v868, %v794
        %v871 = vmul.f32 %v864, %v795
        %v872 = vmul.f32 %v868, %v796
        %v873 = vadd.f32 %v741, %v869
        %v874 = vadd.f32 %v742, %v870
        %v875 = vadd.f32 %v743, %v871
        %v876 = vadd.f32 %v744, %v872
        %v877 = vlaneseq
        %v878 = vshrl.u32 %v877, 7
        %v879 = vsub.s32 2, %v878
        %v880 = vrot.slane %v615, %v879
        %v881 = vlaneseq
        %v882 = vshrl.u32 %v881, 7
        %v883 = vsub.s32 2, %v882
        %v884 = vrot.slane %v616, %v883
        %v885 = vmul.f32 %v880, %v793
        %v886 = vmul.f32 %v884, %v794
        %v887 = vmul.f32 %v880, %v795
        %v888 = vmul.f32 %v884, %v796
        %v889 = vadd.f32 %v757, %v885
        %v890 = vadd.f32 %v758, %v886
        %v891 = vadd.f32 %v759, %v887
        %v892 = vadd.f32 %v760, %v888
        %v893 = vlaneseq
        %v894 = vshrl.u32 %v893, 7
        %v895 = vsub.s32 2, %v894
        %v896 = vrot.slane %v631, %v895
        %v897 = vlaneseq
        %v898 = vshrl.u32 %v897, 7
        %v899 = vsub.s32 2, %v898
        %v900 = vrot.slane %v632, %v899
        %v901 = vmul.f32 %v896, %v793
        %v902 = vmul.f32 %v900, %v794
        %v903 = vmul.f32 %v896, %v795
        %v904 = vmul.f32 %v900, %v796
        %v905 = vadd.f32 %v773, %v901
        %v906 = vadd.f32 %v774, %v902
        %v907 = vadd.f32 %v775, %v903
        %v908 = vadd.f32 %v776, %v904
        %v909 = vlaneseq
        %v910 = vshrl.u32 %v909, 7
        %v911 = vsub.s32 2, %v910
        %v912 = vrot.slane %v647, %v911
        %v913 = vlaneseq
        %v914 = vshrl.u32 %v913, 7
        %v915 = vsub.s32 2, %v914
        %v916 = vrot.slane %v648, %v915
        %v917 = vmul.f32 %v912, %v793
        %v918 = vmul.f32 %v916, %v794
        %v919 = vmul.f32 %v912, %v795
        %v920 = vmul.f32 %v916, %v796
        %v921 = vadd.f32 %v789, %v917
        %v922 = vadd.f32 %v790, %v918
        %v923 = vadd.f32 %v791, %v919
        %v924 = vadd.f32 %v792, %v920
        %v925 = vld [vmem:[%s245 + $0x60] sm:$0xff]
        %v926 = vld [vmem:[%s245 + $0x68] sm:$0xff]
        %v927 = vld [vmem:[%s245 + $0x70] sm:$0xff]
        %v928 = vld [vmem:[%s245 + $0x78] sm:$0xff]
        %v929 = vlaneseq
        %v930 = vshrl.u32 %v929, 7
        %v931 = vsub.s32 3, %v930
        %v932 = vrot.slane %v535, %v931
        %v933 = vlaneseq
        %v934 = vshrl.u32 %v933, 7
        %v935 = vsub.s32 3, %v934
        %v936 = vrot.slane %v536, %v935
        %v937 = vmul.f32 %v932, %v925
        %v938 = vmul.f32 %v936, %v926
        %v939 = vmul.f32 %v932, %v927
        %v940 = vmul.f32 %v936, %v928
        %v941 = vadd.f32 %v809, %v937
        %v942 = vadd.f32 %v810, %v938
        %v943 = vadd.f32 %v811, %v939
        %v944 = vadd.f32 %v812, %v940
        %v945 = vlaneseq
        %v946 = vshrl.u32 %v945, 7
        %v947 = vsub.s32 3, %v946
        %v948 = vrot.slane %v551, %v947
        %v949 = vlaneseq
        %v950 = vshrl.u32 %v949, 7
        %v951 = vsub.s32 3, %v950
        %v952 = vrot.slane %v552, %v951
        %v953 = vmul.f32 %v948, %v925
        %v954 = vmul.f32 %v952, %v926
        %v955 = vmul.f32 %v948, %v927
        %v956 = vmul.f32 %v952, %v928
        %v957 = vadd.f32 %v825, %v953
        %v958 = vadd.f32 %v826, %v954
        %v959 = vadd.f32 %v827, %v955
        %v960 = vadd.f32 %v828, %v956
        %v961 = vlaneseq
        %v962 = vshrl.u32 %v961, 7
        %v963 = vsub.s32 3, %v962
        %v964 = vrot.slane %v567, %v963
        %v965 = vlaneseq
        %v966 = vshrl.u32 %v965, 7
        %v967 = vsub.s32 3, %v966
        %v968 = vrot.slane %v568, %v967
        %v969 = vmul.f32 %v964, %v925
        %v970 = vmul.f32 %v968, %v926
        %v971 = vmul.f32 %v964, %v927
        %v972 = vmul.f32 %v968, %v928
        %v973 = vadd.f32 %v841, %v969
        %v974 = vadd.f32 %v842, %v970
        %v975 = vadd.f32 %v843, %v971
        %v976 = vadd.f32 %v844, %v972
        %v977 = vlaneseq
        %v978 = vshrl.u32 %v977, 7
        %v979 = vsub.s32 3, %v978
        %v980 = vrot.slane %v583, %v979
        %v981 = vlaneseq
        %v982 = vshrl.u32 %v981, 7
        %v983 = vsub.s32 3, %v982
        %v984 = vrot.slane %v584, %v983
        %v985 = vmul.f32 %v980, %v925
        %v986 = vmul.f32 %v984, %v926
        %v987 = vmul.f32 %v980, %v927
        %v988 = vmul.f32 %v984, %v928
        %v989 = vadd.f32 %v857, %v985
        %v990 = vadd.f32 %v858, %v986
        %v991 = vadd.f32 %v859, %v987
        %v992 = vadd.f32 %v860, %v988
        %v993 = vlaneseq
        %v994 = vshrl.u32 %v993, 7
        %v995 = vsub.s32 3, %v994
        %v996 = vrot.slane %v599, %v995
        %v997 = vlaneseq
        %v998 = vshrl.u32 %v997, 7
        %v999 = vsub.s32 3, %v998
        %v1000 = vrot.slane %v600, %v999
        %v1001 = vmul.f32 %v996, %v925
        %v1002 = vmul.f32 %v1000, %v926
        %v1003 = vmul.f32 %v996, %v927
        %v1004 = vmul.f32 %v1000, %v928
        %v1005 = vadd.f32 %v873, %v1001
        %v1006 = vadd.f32 %v874, %v1002
        %v1007 = vadd.f32 %v875, %v1003
        %v1008 = vadd.f32 %v876, %v1004
        %v1009 = vlaneseq
        %v1010 = vshrl.u32 %v1009, 7
        %v1011 = vsub.s32 3, %v1010
        %v1012 = vrot.slane %v615, %v1011
        %v1013 = vlaneseq
        %v1014 = vshrl.u32 %v1013, 7
        %v1015 = vsub.s32 3, %v1014
        %v1016 = vrot.slane %v616, %v1015
        %v1017 = vmul.f32 %v1012, %v925
        %v1018 = vmul.f32 %v1016, %v926
        %v1019 = vmul.f32 %v1012, %v927
        %v1020 = vmul.f32 %v1016, %v928
        %v1021 = vadd.f32 %v889, %v1017
        %v1022 = vadd.f32 %v890, %v1018
        %v1023 = vadd.f32 %v891, %v1019
        %v1024 = vadd.f32 %v892, %v1020
        %v1025 = vlaneseq
        %v1026 = vshrl.u32 %v1025, 7
        %v1027 = vsub.s32 3, %v1026
        %v1028 = vrot.slane %v631, %v1027
        %v1029 = vlaneseq
        %v1030 = vshrl.u32 %v1029, 7
        %v1031 = vsub.s32 3, %v1030
        %v1032 = vrot.slane %v632, %v1031
        %v1033 = vmul.f32 %v1028, %v925
        %v1034 = vmul.f32 %v1032, %v926
        %v1035 = vmul.f32 %v1028, %v927
        %v1036 = vmul.f32 %v1032, %v928
        %v1037 = vadd.f32 %v905, %v1033
        %v1038 = vadd.f32 %v906, %v1034
        %v1039 = vadd.f32 %v907, %v1035
        %v1040 = vadd.f32 %v908, %v1036
        %v1041 = vlaneseq
        %v1042 = vshrl.u32 %v1041, 7
        %v1043 = vsub.s32 3, %v1042
        %v1044 = vrot.slane %v647, %v1043
        %v1045 = vlaneseq
        %v1046 = vshrl.u32 %v1045, 7
        %v1047 = vsub.s32 3, %v1046
        %v1048 = vrot.slane %v648, %v1047
        %v1049 = vmul.f32 %v1044, %v925
        %v1050 = vmul.f32 %v1048, %v926
        %v1051 = vmul.f32 %v1044, %v927
        %v1052 = vmul.f32 %v1048, %v928
        %v1053 = vadd.f32 %v921, %v1049
        %v1054 = vadd.f32 %v922, %v1050
        %v1055 = vadd.f32 %v923, %v1051
        %v1056 = vadd.f32 %v924, %v1052
        %v1057 = vld [vmem:[%s245 + $0x80] sm:$0xff]
        %v1058 = vld [vmem:[%s245 + $0x88] sm:$0xff]
        %v1059 = vld [vmem:[%s245 + $0x90] sm:$0xff]
        %v1060 = vld [vmem:[%s245 + $0x98] sm:$0xff]
        %v1061 = vlaneseq
        %v1062 = vshrl.u32 %v1061, 7
        %v1063 = vsub.s32 4, %v1062
        %v1064 = vrot.slane %v535, %v1063
        %v1065 = vlaneseq
        %v1066 = vshrl.u32 %v1065, 7
        %v1067 = vsub.s32 4, %v1066
        %v1068 = vrot.slane %v536, %v1067
        %v1069 = vmul.f32 %v1064, %v1057
        %v1070 = vmul.f32 %v1068, %v1058
        %v1071 = vmul.f32 %v1064, %v1059
        %v1072 = vmul.f32 %v1068, %v1060
        %v1073 = vadd.f32 %v941, %v1069
        %v1074 = vadd.f32 %v942, %v1070
        %v1075 = vadd.f32 %v943, %v1071
        %v1076 = vadd.f32 %v944, %v1072
        %v1077 = vlaneseq
        %v1078 = vshrl.u32 %v1077, 7
        %v1079 = vsub.s32 4, %v1078
        %v1080 = vrot.slane %v551, %v1079
        %v1081 = vlaneseq
        %v1082 = vshrl.u32 %v1081, 7
        %v1083 = vsub.s32 4, %v1082
        %v1084 = vrot.slane %v552, %v1083
        %v1085 = vmul.f32 %v1080, %v1057
        %v1086 = vmul.f32 %v1084, %v1058
        %v1087 = vmul.f32 %v1080, %v1059
        %v1088 = vmul.f32 %v1084, %v1060
        %v1089 = vadd.f32 %v957, %v1085
        %v1090 = vadd.f32 %v958, %v1086
        %v1091 = vadd.f32 %v959, %v1087
        %v1092 = vadd.f32 %v960, %v1088
        %v1093 = vlaneseq
        %v1094 = vshrl.u32 %v1093, 7
        %v1095 = vsub.s32 4, %v1094
        %v1096 = vrot.slane %v567, %v1095
        %v1097 = vlaneseq
        %v1098 = vshrl.u32 %v1097, 7
        %v1099 = vsub.s32 4, %v1098
        %v1100 = vrot.slane %v568, %v1099
        %v1101 = vmul.f32 %v1096, %v1057
        %v1102 = vmul.f32 %v1100, %v1058
        %v1103 = vmul.f32 %v1096, %v1059
        %v1104 = vmul.f32 %v1100, %v1060
        %v1105 = vadd.f32 %v973, %v1101
        %v1106 = vadd.f32 %v974, %v1102
        %v1107 = vadd.f32 %v975, %v1103
        %v1108 = vadd.f32 %v976, %v1104
        %v1109 = vlaneseq
        %v1110 = vshrl.u32 %v1109, 7
        %v1111 = vsub.s32 4, %v1110
        %v1112 = vrot.slane %v583, %v1111
        %v1113 = vlaneseq
        %v1114 = vshrl.u32 %v1113, 7
        %v1115 = vsub.s32 4, %v1114
        %v1116 = vrot.slane %v584, %v1115
        %v1117 = vmul.f32 %v1112, %v1057
        %v1118 = vmul.f32 %v1116, %v1058
        %v1119 = vmul.f32 %v1112, %v1059
        %v1120 = vmul.f32 %v1116, %v1060
        %v1121 = vadd.f32 %v989, %v1117
        %v1122 = vadd.f32 %v990, %v1118
        %v1123 = vadd.f32 %v991, %v1119
        %v1124 = vadd.f32 %v992, %v1120
        %v1125 = vlaneseq
        %v1126 = vshrl.u32 %v1125, 7
        %v1127 = vsub.s32 4, %v1126
        %v1128 = vrot.slane %v599, %v1127
        %v1129 = vlaneseq
        %v1130 = vshrl.u32 %v1129, 7
        %v1131 = vsub.s32 4, %v1130
        %v1132 = vrot.slane %v600, %v1131
        %v1133 = vmul.f32 %v1128, %v1057
        %v1134 = vmul.f32 %v1132, %v1058
        %v1135 = vmul.f32 %v1128, %v1059
        %v1136 = vmul.f32 %v1132, %v1060
        %v1137 = vadd.f32 %v1005, %v1133
        %v1138 = vadd.f32 %v1006, %v1134
        %v1139 = vadd.f32 %v1007, %v1135
        %v1140 = vadd.f32 %v1008, %v1136
        %v1141 = vlaneseq
        %v1142 = vshrl.u32 %v1141, 7
        %v1143 = vsub.s32 4, %v1142
        %v1144 = vrot.slane %v615, %v1143
        %v1145 = vlaneseq
        %v1146 = vshrl.u32 %v1145, 7
        %v1147 = vsub.s32 4, %v1146
        %v1148 = vrot.slane %v616, %v1147
        %v1149 = vmul.f32 %v1144, %v1057
        %v1150 = vmul.f32 %v1148, %v1058
        %v1151 = vmul.f32 %v1144, %v1059
        %v1152 = vmul.f32 %v1148, %v1060
        %v1153 = vadd.f32 %v1021, %v1149
        %v1154 = vadd.f32 %v1022, %v1150
        %v1155 = vadd.f32 %v1023, %v1151
        %v1156 = vadd.f32 %v1024, %v1152
        %v1157 = vlaneseq
        %v1158 = vshrl.u32 %v1157, 7
        %v1159 = vsub.s32 4, %v1158
        %v1160 = vrot.slane %v631, %v1159
        %v1161 = vlaneseq
        %v1162 = vshrl.u32 %v1161, 7
        %v1163 = vsub.s32 4, %v1162
        %v1164 = vrot.slane %v632, %v1163
        %v1165 = vmul.f32 %v1160, %v1057
        %v1166 = vmul.f32 %v1164, %v1058
        %v1167 = vmul.f32 %v1160, %v1059
        %v1168 = vmul.f32 %v1164, %v1060
        %v1169 = vadd.f32 %v1037, %v1165
        %v1170 = vadd.f32 %v1038, %v1166
        %v1171 = vadd.f32 %v1039, %v1167
        %v1172 = vadd.f32 %v1040, %v1168
        %v1173 = vlaneseq
        %v1174 = vshrl.u32 %v1173, 7
        %v1175 = vsub.s32 4, %v1174
        %v1176 = vrot.slane %v647, %v1175
        %v1177 = vlaneseq
        %v1178 = vshrl.u32 %v1177, 7
        %v1179 = vsub.s32 4, %v1178
        %v1180 = vrot.slane %v648, %v1179
        %v1181 = vmul.f32 %v1176, %v1057
        %v1182 = vmul.f32 %v1180, %v1058
        %v1183 = vmul.f32 %v1176, %v1059
        %v1184 = vmul.f32 %v1180, %v1060
        %v1185 = vadd.f32 %v1053, %v1181
        %v1186 = vadd.f32 %v1054, %v1182
        %v1187 = vadd.f32 %v1055, %v1183
        %v1188 = vadd.f32 %v1056, %v1184
        %v1189 = vld [vmem:[%s245 + $0xa0] sm:$0xff]
        %v1190 = vld [vmem:[%s245 + $0xa8] sm:$0xff]
        %v1191 = vld [vmem:[%s245 + $0xb0] sm:$0xff]
        %v1192 = vld [vmem:[%s245 + $0xb8] sm:$0xff]
        %v1193 = vlaneseq
        %v1194 = vshrl.u32 %v1193, 7
        %v1195 = vsub.s32 5, %v1194
        %v1196 = vrot.slane %v535, %v1195
        %v1197 = vlaneseq
        %v1198 = vshrl.u32 %v1197, 7
        %v1199 = vsub.s32 5, %v1198
        %v1200 = vrot.slane %v536, %v1199
        %v1201 = vmul.f32 %v1196, %v1189
        %v1202 = vmul.f32 %v1200, %v1190
        %v1203 = vmul.f32 %v1196, %v1191
        %v1204 = vmul.f32 %v1200, %v1192
        %v1205 = vadd.f32 %v1073, %v1201
        %v1206 = vadd.f32 %v1074, %v1202
        %v1207 = vadd.f32 %v1075, %v1203
        %v1208 = vadd.f32 %v1076, %v1204
        %v1209 = vlaneseq
        %v1210 = vshrl.u32 %v1209, 7
        %v1211 = vsub.s32 5, %v1210
        %v1212 = vrot.slane %v551, %v1211
        %v1213 = vlaneseq
        %v1214 = vshrl.u32 %v1213, 7
        %v1215 = vsub.s32 5, %v1214
        %v1216 = vrot.slane %v552, %v1215
        %v1217 = vmul.f32 %v1212, %v1189
        %v1218 = vmul.f32 %v1216, %v1190
        %v1219 = vmul.f32 %v1212, %v1191
        %v1220 = vmul.f32 %v1216, %v1192
        %v1221 = vadd.f32 %v1089, %v1217
        %v1222 = vadd.f32 %v1090, %v1218
        %v1223 = vadd.f32 %v1091, %v1219
        %v1224 = vadd.f32 %v1092, %v1220
        %v1225 = vlaneseq
        %v1226 = vshrl.u32 %v1225, 7
        %v1227 = vsub.s32 5, %v1226
        %v1228 = vrot.slane %v567, %v1227
        %v1229 = vlaneseq
        %v1230 = vshrl.u32 %v1229, 7
        %v1231 = vsub.s32 5, %v1230
        %v1232 = vrot.slane %v568, %v1231
        %v1233 = vmul.f32 %v1228, %v1189
        %v1234 = vmul.f32 %v1232, %v1190
        %v1235 = vmul.f32 %v1228, %v1191
        %v1236 = vmul.f32 %v1232, %v1192
        %v1237 = vadd.f32 %v1105, %v1233
        %v1238 = vadd.f32 %v1106, %v1234
        %v1239 = vadd.f32 %v1107, %v1235
        %v1240 = vadd.f32 %v1108, %v1236
        %v1241 = vlaneseq
        %v1242 = vshrl.u32 %v1241, 7
        %v1243 = vsub.s32 5, %v1242
        %v1244 = vrot.slane %v583, %v1243
        %v1245 = vlaneseq
        %v1246 = vshrl.u32 %v1245, 7
        %v1247 = vsub.s32 5, %v1246
        %v1248 = vrot.slane %v584, %v1247
        %v1249 = vmul.f32 %v1244, %v1189
        %v1250 = vmul.f32 %v1248, %v1190
        %v1251 = vmul.f32 %v1244, %v1191
        %v1252 = vmul.f32 %v1248, %v1192
        %v1253 = vadd.f32 %v1121, %v1249
        %v1254 = vadd.f32 %v1122, %v1250
        %v1255 = vadd.f32 %v1123, %v1251
        %v1256 = vadd.f32 %v1124, %v1252
        %v1257 = vlaneseq
        %v1258 = vshrl.u32 %v1257, 7
        %v1259 = vsub.s32 5, %v1258
        %v1260 = vrot.slane %v599, %v1259
        %v1261 = vlaneseq
        %v1262 = vshrl.u32 %v1261, 7
        %v1263 = vsub.s32 5, %v1262
        %v1264 = vrot.slane %v600, %v1263
        %v1265 = vmul.f32 %v1260, %v1189
        %v1266 = vmul.f32 %v1264, %v1190
        %v1267 = vmul.f32 %v1260, %v1191
        %v1268 = vmul.f32 %v1264, %v1192
        %v1269 = vadd.f32 %v1137, %v1265
        %v1270 = vadd.f32 %v1138, %v1266
        %v1271 = vadd.f32 %v1139, %v1267
        %v1272 = vadd.f32 %v1140, %v1268
        %v1273 = vlaneseq
        %v1274 = vshrl.u32 %v1273, 7
        %v1275 = vsub.s32 5, %v1274
        %v1276 = vrot.slane %v615, %v1275
        %v1277 = vlaneseq
        %v1278 = vshrl.u32 %v1277, 7
        %v1279 = vsub.s32 5, %v1278
        %v1280 = vrot.slane %v616, %v1279
        %v1281 = vmul.f32 %v1276, %v1189
        %v1282 = vmul.f32 %v1280, %v1190
        %v1283 = vmul.f32 %v1276, %v1191
        %v1284 = vmul.f32 %v1280, %v1192
        %v1285 = vadd.f32 %v1153, %v1281
        %v1286 = vadd.f32 %v1154, %v1282
        %v1287 = vadd.f32 %v1155, %v1283
        %v1288 = vadd.f32 %v1156, %v1284
        %v1289 = vlaneseq
        %v1290 = vshrl.u32 %v1289, 7
        %v1291 = vsub.s32 5, %v1290
        %v1292 = vrot.slane %v631, %v1291
        %v1293 = vlaneseq
        %v1294 = vshrl.u32 %v1293, 7
        %v1295 = vsub.s32 5, %v1294
        %v1296 = vrot.slane %v632, %v1295
        %v1297 = vmul.f32 %v1292, %v1189
        %v1298 = vmul.f32 %v1296, %v1190
        %v1299 = vmul.f32 %v1292, %v1191
        %v1300 = vmul.f32 %v1296, %v1192
        %v1301 = vadd.f32 %v1169, %v1297
        %v1302 = vadd.f32 %v1170, %v1298
        %v1303 = vadd.f32 %v1171, %v1299
        %v1304 = vadd.f32 %v1172, %v1300
        %v1305 = vlaneseq
        %v1306 = vshrl.u32 %v1305, 7
        %v1307 = vsub.s32 5, %v1306
        %v1308 = vrot.slane %v647, %v1307
        %v1309 = vlaneseq
        %v1310 = vshrl.u32 %v1309, 7
        %v1311 = vsub.s32 5, %v1310
        %v1312 = vrot.slane %v648, %v1311
        %v1313 = vmul.f32 %v1308, %v1189
        %v1314 = vmul.f32 %v1312, %v1190
        %v1315 = vmul.f32 %v1308, %v1191
        %v1316 = vmul.f32 %v1312, %v1192
        %v1317 = vadd.f32 %v1185, %v1313
        %v1318 = vadd.f32 %v1186, %v1314
        %v1319 = vadd.f32 %v1187, %v1315
        %v1320 = vadd.f32 %v1188, %v1316
        %v1321 = vld [vmem:[%s245 + $0xc0] sm:$0xff]
        %v1322 = vld [vmem:[%s245 + $0xc8] sm:$0xff]
        %v1323 = vld [vmem:[%s245 + $0xd0] sm:$0xff]
        %v1324 = vld [vmem:[%s245 + $0xd8] sm:$0xff]
        %v1325 = vlaneseq
        %v1326 = vshrl.u32 %v1325, 7
        %v1327 = vsub.s32 6, %v1326
        %v1328 = vrot.slane %v535, %v1327
        %v1329 = vlaneseq
        %v1330 = vshrl.u32 %v1329, 7
        %v1331 = vsub.s32 6, %v1330
        %v1332 = vrot.slane %v536, %v1331
        %v1333 = vmul.f32 %v1328, %v1321
        %v1334 = vmul.f32 %v1332, %v1322
        %v1335 = vmul.f32 %v1328, %v1323
        %v1336 = vmul.f32 %v1332, %v1324
        %v1337 = vadd.f32 %v1205, %v1333
        %v1338 = vadd.f32 %v1206, %v1334
        %v1339 = vadd.f32 %v1207, %v1335
        %v1340 = vadd.f32 %v1208, %v1336
        %v1341 = vlaneseq
        %v1342 = vshrl.u32 %v1341, 7
        %v1343 = vsub.s32 6, %v1342
        %v1344 = vrot.slane %v551, %v1343
        %v1345 = vlaneseq
        %v1346 = vshrl.u32 %v1345, 7
        %v1347 = vsub.s32 6, %v1346
        %v1348 = vrot.slane %v552, %v1347
        %v1349 = vmul.f32 %v1344, %v1321
        %v1350 = vmul.f32 %v1348, %v1322
        %v1351 = vmul.f32 %v1344, %v1323
        %v1352 = vmul.f32 %v1348, %v1324
        %v1353 = vadd.f32 %v1221, %v1349
        %v1354 = vadd.f32 %v1222, %v1350
        %v1355 = vadd.f32 %v1223, %v1351
        %v1356 = vadd.f32 %v1224, %v1352
        %v1357 = vlaneseq
        %v1358 = vshrl.u32 %v1357, 7
        %v1359 = vsub.s32 6, %v1358
        %v1360 = vrot.slane %v567, %v1359
        %v1361 = vlaneseq
        %v1362 = vshrl.u32 %v1361, 7
        %v1363 = vsub.s32 6, %v1362
        %v1364 = vrot.slane %v568, %v1363
        %v1365 = vmul.f32 %v1360, %v1321
        %v1366 = vmul.f32 %v1364, %v1322
        %v1367 = vmul.f32 %v1360, %v1323
        %v1368 = vmul.f32 %v1364, %v1324
        %v1369 = vadd.f32 %v1237, %v1365
        %v1370 = vadd.f32 %v1238, %v1366
        %v1371 = vadd.f32 %v1239, %v1367
        %v1372 = vadd.f32 %v1240, %v1368
        %v1373 = vlaneseq
        %v1374 = vshrl.u32 %v1373, 7
        %v1375 = vsub.s32 6, %v1374
        %v1376 = vrot.slane %v583, %v1375
        %v1377 = vlaneseq
        %v1378 = vshrl.u32 %v1377, 7
        %v1379 = vsub.s32 6, %v1378
        %v1380 = vrot.slane %v584, %v1379
        %v1381 = vmul.f32 %v1376, %v1321
        %v1382 = vmul.f32 %v1380, %v1322
        %v1383 = vmul.f32 %v1376, %v1323
        %v1384 = vmul.f32 %v1380, %v1324
        %v1385 = vadd.f32 %v1253, %v1381
        %v1386 = vadd.f32 %v1254, %v1382
        %v1387 = vadd.f32 %v1255, %v1383
        %v1388 = vadd.f32 %v1256, %v1384
        %v1389 = vlaneseq
        %v1390 = vshrl.u32 %v1389, 7
        %v1391 = vsub.s32 6, %v1390
        %v1392 = vrot.slane %v599, %v1391
        %v1393 = vlaneseq
        %v1394 = vshrl.u32 %v1393, 7
        %v1395 = vsub.s32 6, %v1394
        %v1396 = vrot.slane %v600, %v1395
        %v1397 = vmul.f32 %v1392, %v1321
        %v1398 = vmul.f32 %v1396, %v1322
        %v1399 = vmul.f32 %v1392, %v1323
        %v1400 = vmul.f32 %v1396, %v1324
        %v1401 = vadd.f32 %v1269, %v1397
        %v1402 = vadd.f32 %v1270, %v1398
        %v1403 = vadd.f32 %v1271, %v1399
        %v1404 = vadd.f32 %v1272, %v1400
        %v1405 = vlaneseq
        %v1406 = vshrl.u32 %v1405, 7
        %v1407 = vsub.s32 6, %v1406
        %v1408 = vrot.slane %v615, %v1407
        %v1409 = vlaneseq
        %v1410 = vshrl.u32 %v1409, 7
        %v1411 = vsub.s32 6, %v1410
        %v1412 = vrot.slane %v616, %v1411
        %v1413 = vmul.f32 %v1408, %v1321
        %v1414 = vmul.f32 %v1412, %v1322
        %v1415 = vmul.f32 %v1408, %v1323
        %v1416 = vmul.f32 %v1412, %v1324
        %v1417 = vadd.f32 %v1285, %v1413
        %v1418 = vadd.f32 %v1286, %v1414
        %v1419 = vadd.f32 %v1287, %v1415
        %v1420 = vadd.f32 %v1288, %v1416
        %v1421 = vlaneseq
        %v1422 = vshrl.u32 %v1421, 7
        %v1423 = vsub.s32 6, %v1422
        %v1424 = vrot.slane %v631, %v1423
        %v1425 = vlaneseq
        %v1426 = vshrl.u32 %v1425, 7
        %v1427 = vsub.s32 6, %v1426
        %v1428 = vrot.slane %v632, %v1427
        %v1429 = vmul.f32 %v1424, %v1321
        %v1430 = vmul.f32 %v1428, %v1322
        %v1431 = vmul.f32 %v1424, %v1323
        %v1432 = vmul.f32 %v1428, %v1324
        %v1433 = vadd.f32 %v1301, %v1429
        %v1434 = vadd.f32 %v1302, %v1430
        %v1435 = vadd.f32 %v1303, %v1431
        %v1436 = vadd.f32 %v1304, %v1432
        %v1437 = vlaneseq
        %v1438 = vshrl.u32 %v1437, 7
        %v1439 = vsub.s32 6, %v1438
        %v1440 = vrot.slane %v647, %v1439
        %v1441 = vlaneseq
        %v1442 = vshrl.u32 %v1441, 7
        %v1443 = vsub.s32 6, %v1442
        %v1444 = vrot.slane %v648, %v1443
        %v1445 = vmul.f32 %v1440, %v1321
        %v1446 = vmul.f32 %v1444, %v1322
        %v1447 = vmul.f32 %v1440, %v1323
        %v1448 = vmul.f32 %v1444, %v1324
        %v1449 = vadd.f32 %v1317, %v1445
        %v1450 = vadd.f32 %v1318, %v1446
        %v1451 = vadd.f32 %v1319, %v1447
        %v1452 = vadd.f32 %v1320, %v1448
        %v1453 = vld [vmem:[%s245 + $0xe0] sm:$0xff]
        %v1454 = vld [vmem:[%s245 + $0xe8] sm:$0xff]
        %v1455 = vld [vmem:[%s245 + $0xf0] sm:$0xff]
        %v1456 = vld [vmem:[%s245 + $0xf8] sm:$0xff]
        %v1457 = vlaneseq
        %v1458 = vshrl.u32 %v1457, 7
        %v1459 = vsub.s32 7, %v1458
        %v1460 = vrot.slane %v535, %v1459
        %v1461 = vlaneseq
        %v1462 = vshrl.u32 %v1461, 7
        %v1463 = vsub.s32 7, %v1462
        %v1464 = vrot.slane %v536, %v1463
        %v1465 = vmul.f32 %v1460, %v1453
        %v1466 = vmul.f32 %v1464, %v1454
        %v1467 = vmul.f32 %v1460, %v1455
        %v1468 = vmul.f32 %v1464, %v1456
        %v1469 = vadd.f32 %v1337, %v1465
        %v1470 = vadd.f32 %v1338, %v1466
        %v1471 = vadd.f32 %v1339, %v1467
        %v1472 = vadd.f32 %v1340, %v1468
        %v1473 = vlaneseq
        %v1474 = vshrl.u32 %v1473, 7
        %v1475 = vsub.s32 7, %v1474
        %v1476 = vrot.slane %v551, %v1475
        %v1477 = vlaneseq
        %v1478 = vshrl.u32 %v1477, 7
        %v1479 = vsub.s32 7, %v1478
        %v1480 = vrot.slane %v552, %v1479
        %v1481 = vmul.f32 %v1476, %v1453
        %v1482 = vmul.f32 %v1480, %v1454
        %v1483 = vmul.f32 %v1476, %v1455
        %v1484 = vmul.f32 %v1480, %v1456
        %v1485 = vadd.f32 %v1353, %v1481
        %v1486 = vadd.f32 %v1354, %v1482
        %v1487 = vadd.f32 %v1355, %v1483
        %v1488 = vadd.f32 %v1356, %v1484
        %v1489 = vlaneseq
        %v1490 = vshrl.u32 %v1489, 7
        %v1491 = vsub.s32 7, %v1490
        %v1492 = vrot.slane %v567, %v1491
        %v1493 = vlaneseq
        %v1494 = vshrl.u32 %v1493, 7
        %v1495 = vsub.s32 7, %v1494
        %v1496 = vrot.slane %v568, %v1495
        %v1497 = vmul.f32 %v1492, %v1453
        %v1498 = vmul.f32 %v1496, %v1454
        %v1499 = vmul.f32 %v1492, %v1455
        %v1500 = vmul.f32 %v1496, %v1456
        %v1501 = vadd.f32 %v1369, %v1497
        %v1502 = vadd.f32 %v1370, %v1498
        %v1503 = vadd.f32 %v1371, %v1499
        %v1504 = vadd.f32 %v1372, %v1500
        %v1505 = vlaneseq
        %v1506 = vshrl.u32 %v1505, 7
        %v1507 = vsub.s32 7, %v1506
        %v1508 = vrot.slane %v583, %v1507
        %v1509 = vlaneseq
        %v1510 = vshrl.u32 %v1509, 7
        %v1511 = vsub.s32 7, %v1510
        %v1512 = vrot.slane %v584, %v1511
        %v1513 = vmul.f32 %v1508, %v1453
        %v1514 = vmul.f32 %v1512, %v1454
        %v1515 = vmul.f32 %v1508, %v1455
        %v1516 = vmul.f32 %v1512, %v1456
        %v1517 = vadd.f32 %v1385, %v1513
        %v1518 = vadd.f32 %v1386, %v1514
        %v1519 = vadd.f32 %v1387, %v1515
        %v1520 = vadd.f32 %v1388, %v1516
        %v1521 = vlaneseq
        %v1522 = vshrl.u32 %v1521, 7
        %v1523 = vsub.s32 7, %v1522
        %v1524 = vrot.slane %v599, %v1523
        %v1525 = vlaneseq
        %v1526 = vshrl.u32 %v1525, 7
        %v1527 = vsub.s32 7, %v1526
        %v1528 = vrot.slane %v600, %v1527
        %v1529 = vmul.f32 %v1524, %v1453
        %v1530 = vmul.f32 %v1528, %v1454
        %v1531 = vmul.f32 %v1524, %v1455
        %v1532 = vmul.f32 %v1528, %v1456
        %v1533 = vadd.f32 %v1401, %v1529
        %v1534 = vadd.f32 %v1402, %v1530
        %v1535 = vadd.f32 %v1403, %v1531
        %v1536 = vadd.f32 %v1404, %v1532
        %v1537 = vlaneseq
        %v1538 = vshrl.u32 %v1537, 7
        %v1539 = vsub.s32 7, %v1538
        %v1540 = vrot.slane %v615, %v1539
        %v1541 = vlaneseq
        %v1542 = vshrl.u32 %v1541, 7
        %v1543 = vsub.s32 7, %v1542
        %v1544 = vrot.slane %v616, %v1543
        %v1545 = vmul.f32 %v1540, %v1453
        %v1546 = vmul.f32 %v1544, %v1454
        %v1547 = vmul.f32 %v1540, %v1455
        %v1548 = vmul.f32 %v1544, %v1456
        %v1549 = vadd.f32 %v1417, %v1545
        %v1550 = vadd.f32 %v1418, %v1546
        %v1551 = vadd.f32 %v1419, %v1547
        %v1552 = vadd.f32 %v1420, %v1548
        %v1553 = vlaneseq
        %v1554 = vshrl.u32 %v1553, 7
        %v1555 = vsub.s32 7, %v1554
        %v1556 = vrot.slane %v631, %v1555
        %v1557 = vlaneseq
        %v1558 = vshrl.u32 %v1557, 7
        %v1559 = vsub.s32 7, %v1558
        %v1560 = vrot.slane %v632, %v1559
        %v1561 = vmul.f32 %v1556, %v1453
        %v1562 = vmul.f32 %v1560, %v1454
        %v1563 = vmul.f32 %v1556, %v1455
        %v1564 = vmul.f32 %v1560, %v1456
        %v1565 = vadd.f32 %v1433, %v1561
        %v1566 = vadd.f32 %v1434, %v1562
        %v1567 = vadd.f32 %v1435, %v1563
        %v1568 = vadd.f32 %v1436, %v1564
        %v1569 = vlaneseq
        %v1570 = vshrl.u32 %v1569, 7
        %v1571 = vsub.s32 7, %v1570
        %v1572 = vrot.slane %v647, %v1571
        %v1573 = vlaneseq
        %v1574 = vshrl.u32 %v1573, 7
        %v1575 = vsub.s32 7, %v1574
        %v1576 = vrot.slane %v648, %v1575
        %v1577 = vmul.f32 %v1572, %v1453
        %v1578 = vmul.f32 %v1576, %v1454
        %v1579 = vmul.f32 %v1572, %v1455
        %v1580 = vmul.f32 %v1576, %v1456
        %v1581 = vadd.f32 %v1449, %v1577
        %v1582 = vadd.f32 %v1450, %v1578
        %v1583 = vadd.f32 %v1451, %v1579
        %v1584 = vadd.f32 %v1452, %v1580
        %v1585 = vld [vmem:[#allocation9] sm:$0xff]
        %v1586 = vld [vmem:[#allocation9 + $0x8] sm:$0xff]
        %v1587 = vld [vmem:[#allocation9 + $0x10] sm:$0xff]
        %v1588 = vld [vmem:[#allocation9 + $0x18] sm:$0xff]
        %1589 = vmatprep.subr.mxu0 %v1470
        %1590 = vmatpush1.msra.mxu0 %v1469
        %1591 = vmatprep.subr.mxu0 %v1472
        %1592 = vmatpush1.msra.mxu0 %v1471
        %1593 = vmatprep.subr.mxu0 %v1486
        %1594 = vmatpush1.msra.mxu0 %v1485
        %1595 = vmatprep.subr.mxu0 %v1488
        %1596 = vmatpush1.msra.mxu0 %v1487
        %1597 = vmatprep.subr.mxu0 %v1502
        %1598 = vmatpush1.msra.mxu0 %v1501
        %1599 = vmatprep.subr.mxu0 %v1504
        %1600 = vmatpush1.msra.mxu0 %v1503
        %1601 = vmatprep.subr.mxu0 %v1518
        %1602 = vmatpush1.msra.mxu0 %v1517
        %1603 = vmatprep.subr.mxu0 %v1520
        %1604 = vmatpush1.msra.mxu0 %v1519
        %1605 = vmatprep.subr.mxu0 %v1534
        %1606 = vmatpush1.msra.mxu0 %v1533
        %1607 = vmatprep.subr.mxu0 %v1536
        %1608 = vmatpush1.msra.mxu0 %v1535
        %1609 = vmatprep.subr.mxu0 %v1550
        %1610 = vmatpush1.msra.mxu0 %v1549
        %1611 = vmatprep.subr.mxu0 %v1552
        %1612 = vmatpush1.msra.mxu0 %v1551
        %1613 = vmatprep.subr.mxu0 %v1566
        %1614 = vmatpush1.msra.mxu0 %v1565
        %1615 = vmatprep.subr.mxu0 %v1568
        %1616 = vmatpush1.msra.mxu0 %v1567
        %1617 = vmatprep.subr.mxu0 %v1582
        %1618 = vmatpush1.msra.mxu0 %v1581
        %1619 = vmatprep.subr.mxu0 %v1584
        %1620 = vmatpush1.msra.mxu0 %v1583
        %1621 = vmatprep.subr.mxu0 0.0
        %1622 = vmatpush1.msra.mxu0 0.0
        %1623 = vmatprep.subr.mxu0 0.0
        %1624 = vmatpush1.msra.mxu0 0.0
        %1625 = vmatprep.subr.mxu0 0.0
        %1626 = vmatpush1.msra.mxu0 0.0
        %1627 = vmatprep.subr.mxu0 0.0
        %1628 = vmatpush1.msra.mxu0 0.0
        %1629 = vmatprep.subr.mxu0 0.0
        %1630 = vmatpush1.msra.mxu0 0.0
        %1631 = vmatprep.subr.mxu0 0.0
        %1632 = vmatpush1.msra.mxu0 0.0
        %1633 = vmatprep.subr.mxu0 0.0
        %1634 = vmatpush1.msra.mxu0 0.0
        %1635 = vmatprep.subr.mxu0 0.0
        %1636 = vmatpush1.msra.mxu0 0.0
        %1637 = vmatprep.subr.mxu0 0.0
        %1638 = vmatpush1.msra.mxu0 0.0
        %1639 = vmatprep.subr.mxu0 0.0
        %1640 = vmatpush1.msra.mxu0 0.0
        %1641 = vmatprep.subr.mxu0 0.0
        %1642 = vmatpush1.msra.mxu0 0.0
        %1643 = vmatprep.subr.mxu0 0.0
        %1644 = vmatpush1.msra.mxu0 0.0
        %1645 = vmatprep.subr.mxu0 0.0
        %1646 = vmatpush1.msra.mxu0 0.0
        %1647 = vmatprep.subr.mxu0 0.0
        %1648 = vmatpush1.msra.mxu0 0.0
        %1649 = vmatprep.subr.mxu0 0.0
        %1650 = vmatpush1.msra.mxu0 0.0
        %1651 = vmatprep.subr.mxu0 0.0
        %1652 = vmatpush1.msra.mxu0 0.0
        %1653 = vmatprep.mubr.f32.mxu0 0.0
        %1654 = vmatmul.mubr.f32.gmra.mrb[0].mxu0 %v1585
        %v1655 = vpop.f32.mrb[0].mxu0
        %v1656 = vadd.f32 0.0, %v1655
        %v1657 = vpop.f32.mrb[0].mxu0
        %v1658 = vadd.f32 0.0, %v1657
        %1659 = vmatprep.mubr.f32.mxu0 0.0
        %1660 = vmatmul.mubr.f32.gmra.mrb[0].mxu0 %v1586
        %v1661 = vpop.f32.mrb[0].mxu0
        %v1662 = vadd.f32 0.0, %v1661
        %v1663 = vpop.f32.mrb[0].mxu0
        %v1664 = vadd.f32 0.0, %v1663
        %1665 = vmatprep.mubr.f32.mxu0 0.0
        %1666 = vmatmul.mubr.f32.gmra.mrb[0].mxu0 %v1587
        %v1667 = vpop.f32.mrb[0].mxu0
        %v1668 = vadd.f32 0.0, %v1667
        %v1669 = vpop.f32.mrb[0].mxu0
        %v1670 = vadd.f32 0.0, %v1669
        %1671 = vmatprep.mubr.f32.mxu0 0.0
        %1672 = vmatmul.mubr.f32.gmra.mrb[0].mxu0 %v1588
        %v1673 = vpop.f32.mrb[0].mxu0
        %v1674 = vadd.f32 0.0, %v1673
        %v1675 = vpop.f32.mrb[0].mxu0
        %v1676 = vadd.f32 0.0, %v1675
        %1677 = vdwg.mxu0
        %1678 = vst [vmem:[%s283] sm:$0xff] %v1656
        %1679 = vst [vmem:[%s283 + $0x8] sm:$0xff] %v1658
        %1680 = vst [vmem:[%s283 + $0x10] sm:$0xff] %v1662
        %1681 = vst [vmem:[%s283 + $0x18] sm:$0xff] %v1664
        %1682 = vst [vmem:[%s283 + $0x20] sm:$0xff] %v1668
        %1683 = vst [vmem:[%s283 + $0x28] sm:$0xff] %v1670
        %1684 = vst [vmem:[%s283 + $0x30] sm:$0xff] %v1674
        %1685 = vst [vmem:[%s283 + $0x38] sm:$0xff] %v1676
        %s1686 = sand.u32 %s127, 1
        %s1687 = scalar_lea.sflag [#allocation4], %s1686
        %s1688 = sand.u32 %s127, 1
        %s1689 = smul.addr %s1688, 64
        %s1690 = scalar_lea.vmem [#allocation10], %s1689
        // Predicated region
        $region53: #{tpu_custom_call.1} parent=35 // pred_check
          %p1691 = pneg %p137
        $region54: #{tpu_custom_call.1} parent=35 // pred_check_branch
          %1693 = sbr.rel (%p1691) target = $region56
        $region55: #{tpu_custom_call.1} parent=35 // pred_region
          %s1694 = smul.u32 2, %s25
          %s1696 = ssub.s32 1024, 1024
          %1697 = vsyncadd %s1687, %s1696
          %s1698 = smul.addr %s1694, 128
          %s1699 = scalar_lea.hbm %s4, %s1698
          %s1700 = sshll.u32 %s1690, 4
          %s1701 = int_to_ptr.vmem [resolvable:$true] %s1700
          %1706 = dma.vmem_to_hbm [thread:$0]  %s1701, 1024, %s1699, %s1687, 256, 2048, 16
        $region56: #{tpu_custom_call.1} parent=35 // pred_fallthru
          _
      $region36: #{tpu_custom_call.1} parent=5 // pred_fallthru
        _
      %p1707 = scmp.le.s32.totalorder 2, %s20
      // Predicated region
      $region57: #{tpu_custom_call.1} parent=5 // pred_check
        %p1708 = pneg %p1707
      $region58: #{tpu_custom_call.1} parent=5 // pred_check_branch
        %1710 = sbr.rel (%p1708) target = $region60
      $region59: #{tpu_custom_call.1} parent=5 // pred_region
        %s1711 = ssub.s32 %s20, 2
        // Predicated region
        $region61: #{tpu_custom_call.1} parent=59 // pred_check
          %p1712 = pneg %p143
        $region62: #{tpu_custom_call.1} parent=59 // pred_check_branch
          %1714 = sbr.rel (%p1712) target = $region64
        $region63: #{tpu_custom_call.1} parent=59 // pred_region
          %s1715 = sand.u32 %s128, 1
          %s1716 = scalar_lea.sflag [#allocation4], %s1715
          %s1717 = sand.u32 %s128, 1
          %s1718 = smul.addr %s1717, 64
          %s1719 = scalar_lea.vmem [#allocation10], %s1718
          %1720 = dma.done %s1716, 1024
        $region64: #{tpu_custom_call.1} parent=59 // pred_fallthru
          _
      $region60: #{tpu_custom_call.1} parent=5 // pred_fallthru
        _
    $region6: #{tpu_custom_call.1} parent=1 // loop_footer
      %s24 = sadd.s32 1, %s20
    $region7: #{tpu_custom_call.1} parent=1 // loop_footer_branch
      %19 = sbr.rel target = $region3
    $region8: #{tpu_custom_call.1} parent=1 // loop_exit
      _
    %1721 = vsyncpa [#allocation3], 1
    %s1722 = scalar_lea.sflag [#allocation3], 1
    %1723 = vsyncpa %s1722, 1
    %1724 = vsyncpa [#allocation7], 1
    %s1725 = scalar_lea.sflag [#allocation7], 1
    %1726 = vsyncpa %s1725, 1
    %1727 = vsyncpa [#allocation4], 1
    %s1728 = scalar_lea.sflag [#allocation4], 1
    %1729 = vsyncpa %s1728, 1
    %1730 = vsyncpa [#allocation5], 1
    %s1731 = scalar_lea.sflag [#allocation5], 1
    %1732 = vsyncpa %s1731, 1

</llo_original>
